<compile_context>
chip_gen: v6e
topology: v6e:2x2x1
jax: 0.10.0
libtpu: 0.0.40
codegen_flags: <defaults>
</compile_context>

<pallas_src>
import functools
import math

import jax
import jax.numpy as jnp
from jax.experimental import pallas as pl
from jax.experimental.pallas import tpu as pltpu


def _round_up(x, m):
    return ((x + m - 1) // m) * m


# ----------------------------- Pallas kernel --------------------------------
def _mha_personalized_kernel(x_ref, u_ref, wbig_ref, bbig_ref, sumd_ref,
                             e8_ref, wobig_ref, bo_ref, o_ref, *, seq, heads):
    """One batch tile per grid step.

    x_ref:     (bt, S*E)        bf16  word embeddings, lanes = s*E + e
    u_ref:     (bt, E)          f32   user GMF embeddings
    wbig_ref:  (S*E, 3*S*E)     bf16  block-diagonal fused QKV weight
    bbig_ref:  (1, 3*S*E)       f32   fused QKV bias (tiled per position)
    sumd_ref:  (S*E, S*H)       bf16  head-selector: sums d within a head, * 1/sqrt(hd)
    e8_ref:    (S*H, S*E)       bf16  head-expander: broadcasts (j,h) weight over d, * 1/S
    wobig_ref: (S*E, E)         bf16  SumJ @ Wo  (folds the j-sum into the out proj)
    bo_ref:    (1, E)           f32   out-proj bias
    o_ref:     (bt, E)                personalized representation
    """
    bt, SE = x_ref.shape
    E = SE // seq

    # ---- fused QKV projection: one big MXU matmul, lanes stay dense --------
    x = x_ref[...]                                                   # (bt, S*E) bf16
    qkv = jnp.dot(x, wbig_ref[...],
                  preferred_element_type=jnp.float32) + bbig_ref[...]  # (bt, 3*S*E) f32
    q = qkv[:, :SE]              # lanes = i*E + h*hd + d
    k = qkv[:, SE:2 * SE]
    v = qkv[:, 2 * SE:]

    def rot_left(a, amt):        # lane rotation via static slices + concat
        if amt == 0:
            return a
        return jnp.concatenate([a[:, amt:], a[:, :amt]], axis=1)

    def rot_right(a, amt):
        if amt == 0:
            return a
        return jnp.concatenate([a[:, -amt:], a[:, :-amt]], axis=1)

    # ---- scores s[b, i, j=(i+r)%S, h] for r = 0..S-1 ------------------------
    # rotate K so key block j lines up with query block i, multiply on the VPU,
    # then sum over d (and apply 1/sqrt(hd)) with ONE big-M matmul.
    prods = [q * rot_left(k, r * E) for r in range(seq)]             # S x (bt, S*E) f32
    prod_all = jnp.concatenate(prods, axis=0).astype(jnp.bfloat16)   # (S*bt, S*E)
    s_all = jnp.dot(prod_all, sumd_ref[...],
                    preferred_element_type=jnp.float32)              # (S*bt, S*H)
    s_list = [s_all[r * bt:(r + 1) * bt, :] for r in range(seq)]     # lanes = i*H + h

    # ---- softmax over keys: pure elementwise across the r arrays ------------
    m = functools.reduce(jnp.maximum, s_list)
    e_list = [jnp.exp(s - m) for s in s_list]
    den = functools.reduce(jnp.add, e_list)
    inv = pl.reciprocal(den, approx=True)

    # ---- mean over queries applied to the softmax matrix (exact identity) ---
    # w[b, j*H + h] = sum_i p[b, i, j, h]   (the 1/S factor is folded into e8)
    w = functools.reduce(
        jnp.add,
        [rot_right(e_list[r] * inv, r * heads) for r in range(seq)])  # (bt, S*H)

    # ---- weighted sum of V + fused output projection ------------------------
    we = jnp.dot(w.astype(jnp.bfloat16), e8_ref[...],
                 preferred_element_type=jnp.float32)                  # (bt, S*E)
    pv = (we * v).astype(jnp.bfloat16)
    out = jnp.dot(pv, wobig_ref[...],
                  preferred_element_type=jnp.float32) + bo_ref[...]   # (bt, E)

    o_ref[...] = (out + 0.5 * u_ref[...]).astype(o_ref.dtype)


# ------------------------- wrapper / weight fusion ---------------------------
def _build_fused_weights(params, S, E, H):
    """Small structured weight matrices (built once, on the host side)."""
    hd = E // H
    eyeS = jnp.eye(S, dtype=jnp.float32)

    def blockdiag(w):  # (E, E) -> (S*E, S*E) block diagonal
        return jnp.einsum("st,ef->setf", eyeS, w).reshape(S * E, S * E)

    wbig = jnp.concatenate(
        [blockdiag(params["wq"]), blockdiag(params["wk"]),
         blockdiag(params["wv"])], axis=1).astype(jnp.bfloat16)          # (S*E, 3*S*E)
    bbig = jnp.concatenate(
        [jnp.tile(params["bq"], (1, S)), jnp.tile(params["bk"], (1, S)),
         jnp.tile(params["bv"], (1, S))], axis=1).astype(jnp.float32)    # (1, 3*S*E)
    # sum over d within each head (+ attention scale)
    sumd = (jnp.kron(jnp.eye(S), jnp.kron(jnp.eye(H), jnp.ones((hd, 1))))
            / math.sqrt(hd)).astype(jnp.bfloat16)                        # (S*E, S*H)
    # broadcast the per-(j, head) weight over the head's d lanes (+ 1/S mean)
    e8 = (jnp.kron(jnp.eye(S), jnp.kron(jnp.eye(H), jnp.ones((1, hd)))) / S
          ).astype(jnp.bfloat16)                                         # (S*H, S*E)
    # fold the sum over j into the output projection: SumJ @ Wo == tile(Wo, (S,1))
    wobig = jnp.tile(params["wo"], (S, 1)).astype(jnp.bfloat16)          # (S*E, E)
    bo = params["bo"].astype(jnp.float32)
    return wbig, bbig, sumd, e8, wobig, bo


def personalized_pallas(sent_flat, user_embed_gmf, fused, seq, embed, heads,
                        block_b=256, out_dtype=jnp.float32):
    """sent_encode (MHA + mean pool) + personalized = pooled + 0.5 * user_gmf."""
    B = sent_flat.shape[0]
    SE = seq * embed
    wbig, bbig, sumd, e8, wobig, bo = fused

    # batch tile: multiple of 8 sublanes; capped at ceil(B/2) so the parallel
    # grid axis has >=2 steps whenever possible (both TensorCores on v7x).
    half = (B + 1) // 2
    bt = max(8, min(block_b, _round_up(half, 8)))
    bt = _round_up(bt, 8)
    Bp = _round_up(B, bt)

    x = sent_flat
    u = user_embed_gmf.astype(jnp.float32)
    if Bp != B:                                  # tail handled by wrapper padding
        x = jnp.pad(x, ((0, Bp - B), (0, 0)))
        u = jnp.pad(u, ((0, Bp - B), (0, 0)))

    kernel = functools.partial(_mha_personalized_kernel, seq=seq, heads=heads)
    out = pl.pallas_call(
        kernel,
        out_shape=jax.ShapeDtypeStruct((Bp, embed), out_dtype),
        grid=(Bp // bt,),
        in_specs=[
            pl.BlockSpec((bt, SE), lambda b: (b, 0)),            # x  (lane-dense)
            pl.BlockSpec((bt, embed), lambda b: (b, 0)),         # user GMF embed
            pl.BlockSpec((SE, 3 * SE), lambda b: (0, 0)),        # fused QKV weight
            pl.BlockSpec((1, 3 * SE), lambda b: (0, 0)),         # fused QKV bias
            pl.BlockSpec((SE, seq * heads), lambda b: (0, 0)),   # head d-sum selector
            pl.BlockSpec((seq * heads, SE), lambda b: (0, 0)),   # head expander
            pl.BlockSpec((SE, embed), lambda b: (0, 0)),         # SumJ @ Wo
            pl.BlockSpec((1, embed), lambda b: (0, 0)),          # bo
        ],
        out_specs=pl.BlockSpec((bt, embed), lambda b: (b, 0)),
        compiler_params=pltpu.CompilerParams(
            dimension_semantics=("parallel",),
            vmem_limit_bytes=48 * 1024 * 1024),
    )(x, u, wbig, bbig, sumd, e8, wobig, bo)
    return out[:B]


def contrastive_search_forward(users, items, query_words, params, head_num,
                               mode="test"):
    """JAX/Pallas equivalent of contrastiveSearch.forward for 'test' and
    'output_embedding' modes."""
    if mode == "output_embedding":
        return jnp.take(params["entity_embed"], items, axis=0)

    B, S = query_words.shape
    E = params["word_embed"].shape[1]

    # word_embed lookup -- glue.  The table is cast to bf16 first so the gathered
    # sent_embed is written/read from HBM at half width.
    # TODO(synk): fuse this gather into the Pallas kernel (scalar prefetch).
    word_tab = params["word_embed"].astype(jnp.bfloat16)
    sent_flat = jnp.take(word_tab, query_words, axis=0).reshape(B, S * E)
    user_embed_gmf = jnp.take(params["entity_embed"], users, axis=0)
    # user_embed_mlp = jnp.take(params["mlp_embed"], users, axis=0)  # unused in 'test'

    fused = _build_fused_weights(params, S, E, head_num)
    personalized = personalized_pallas(sent_flat, user_embed_gmf, fused,
                                       S, E, head_num)
    if mode == "test":
        return personalized
    raise NotImplementedError(
        "train mode losses are undefined in the source module")


# ------------------------- pure-JAX reference --------------------------------
def reference_personalized(sent_embed, user_embed_gmf, p, head_num):
    B, S, E = sent_embed.shape
    hd = E // head_num
    q = sent_embed @ p["wq"] + p["bq"]
    k = sent_embed @ p["wk"] + p["bk"]
    v = sent_embed @ p["wv"] + p["bv"]
    q = q.reshape(B, S, head_num, hd).transpose(0, 2, 1, 3)
    k = k.reshape(B, S, head_num, hd).transpose(0, 2, 1, 3)
    v = v.reshape(B, S, head_num, hd).transpose(0, 2, 1, 3)
    s = jnp.einsum("bhqd,bhkd->bhqk", q, k) / math.sqrt(hd)
    a = jax.nn.softmax(s, axis=-1)
    o = jnp.einsum("bhqk,bhkd->bhqd", a, v)
    o = o.transpose(0, 2, 1, 3).reshape(B, S, E)
    o = o @ p["wo"] + p["bo"]
    return o.mean(axis=1) + 0.5 * user_embed_gmf


# ------------------------- deterministic init --------------------------------
def init_params(key, word_num, entity_num, embedding_size, num_layers=3):
    E = embedding_size
    ks = jax.random.split(key, 16)
    scale = 0.1
    word_embed = jax.random.normal(ks[0], (word_num + 1, E), jnp.float32) * scale
    word_embed = word_embed.at[word_num].set(0.0)        # padding_idx = word_num
    entity_embed = jax.random.normal(ks[1], (entity_num, E), jnp.float32) * scale
    mlp_embed = jax.random.normal(
        ks[2], (entity_num, E * 2 ** (num_layers - 1)), jnp.float32) * scale
    return dict(
        word_embed=word_embed,
        entity_embed=entity_embed,
        mlp_embed=mlp_embed,
        # MultiheadAttention in/out projections (pre-transposed for x @ W)
        wq=jax.random.normal(ks[3], (E, E), jnp.float32) * scale,
        wk=jax.random.normal(ks[4], (E, E), jnp.float32) * scale,
        wv=jax.random.normal(ks[5], (E, E), jnp.float32) * scale,
        bq=jax.random.normal(ks[6], (1, E), jnp.float32) * scale,
        bk=jax.random.normal(ks[7], (1, E), jnp.float32) * scale,
        bv=jax.random.normal(ks[8], (1, E), jnp.float32) * scale,
        wo=jax.random.normal(ks[9], (E, E), jnp.float32) * scale,
        bo=jax.random.normal(ks[10], (1, E), jnp.float32) * scale,
    )


if __name__ == "__main__":
    # small, module-consistent shapes
    word_num = 50
    entity_num = 20
    embedding_size = 32          # == hidden_size
    head_num = 4
    num_query_words = 8          # seq length of query_words
    batch = 2

    key = jax.random.PRNGKey(0)
    k_par, k_u, k_i, k_q = jax.random.split(key, 4)
    params = init_params(k_par, word_num, entity_num, embedding_size)

    users = jax.random.randint(k_u, (batch,), 0, entity_num)
    items = jax.random.randint(k_i, (batch,), 0, entity_num)
    query_words = jax.random.randint(k_q, (batch, num_query_words), 0, word_num)
    query_words = query_words.at[:, -1].set(word_num)    # include padding token

    # mode='test' forward (Pallas kernel: MHA + mean pool + personalization)
    personalized = jax.block_until_ready(contrastive_search_forward(
        users, items, query_words, params, head_num, mode="test"))

    # mode='output_embedding'
    item_embed = jax.block_until_ready(contrastive_search_forward(
        users, items, query_words, params, head_num, mode="output_embedding"))

    # correctness vs. pure-JAX f32 reference (kernel uses bf16 matmul inputs and
    # an approximate reciprocal, hence the loosened tolerance)
    sent_embed = jnp.take(params["word_embed"], query_words, axis=0)
    user_embed_gmf = jnp.take(params["entity_embed"], users, axis=0)
    ref = reference_personalized(sent_embed, user_embed_gmf, params, head_num)
    assert personalized.shape == (batch, embedding_size)
    assert item_embed.shape == (batch, embedding_size)
    assert jnp.allclose(personalized, ref, atol=1e-2, rtol=1e-2), (
        float(jnp.max(jnp.abs(personalized - ref))))

    # second check: multi-tile grid + tail padding path
    batch2 = 10
    k_u2, k_q2 = jax.random.split(jax.random.PRNGKey(1), 2)
    users2 = jax.random.randint(k_u2, (batch2,), 0, entity_num)
    query_words2 = jax.random.randint(k_q2, (batch2, num_query_words), 0, word_num)
    pers2 = jax.block_until_ready(contrastive_search_forward(
        users2, users2, query_words2, params, head_num, mode="test"))
    ref2 = reference_personalized(
        jnp.take(params["word_embed"], query_words2, axis=0),
        jnp.take(params["entity_embed"], users2, axis=0), params, head_num)
    assert jnp.allclose(pers2, ref2, atol=1e-2, rtol=1e-2), (
        float(jnp.max(jnp.abs(pers2 - ref2))))

    print("KERNEL_OK")
</pallas_src>

<mosaic_0001>
module attributes {stable_mosaic.version = 11 : i64} {
  func.func @_mha_personalized_kernel(%arg0: i32, %arg1: memref<8x256xbf16, #tpu.memory_space<vmem>>, %arg2: memref<8x32xf32, #tpu.memory_space<vmem>>, %arg3: memref<256x768xbf16, #tpu.memory_space<vmem>>, %arg4: memref<1x768xf32, #tpu.memory_space<vmem>>, %arg5: memref<256x32xbf16, #tpu.memory_space<vmem>>, %arg6: memref<32x256xbf16, #tpu.memory_space<vmem>>, %arg7: memref<256x32xbf16, #tpu.memory_space<vmem>>, %arg8: memref<1x32xf32, #tpu.memory_space<vmem>>, %arg9: memref<8x32xf32, #tpu.memory_space<vmem>>) attributes {dimension_semantics = [#tpu.dimension_semantics<parallel>], iteration_bounds = array<i64: 1>, scalar_prefetch = 0 : i64, scratch_operands = 0 : i64, tpu.core_type = #tpu.core_type<tc>, window_params = [{transform_indices = @transform_0, window_bounds = array<i64: 8, 256>}, {transform_indices = @transform_1, window_bounds = array<i64: 8, 32>}, {pipeline_mode = #tpu.pipeline_mode<synchronous>, transform_indices = @transform_2, window_bounds = array<i64: 256, 768>}, {pipeline_mode = #tpu.pipeline_mode<synchronous>, transform_indices = @transform_3, window_bounds = array<i64: 1, 768>}, {pipeline_mode = #tpu.pipeline_mode<synchronous>, transform_indices = @transform_4, window_bounds = array<i64: 256, 32>}, {pipeline_mode = #tpu.pipeline_mode<synchronous>, transform_indices = @transform_5, window_bounds = array<i64: 32, 256>}, {pipeline_mode = #tpu.pipeline_mode<synchronous>, transform_indices = @transform_6, window_bounds = array<i64: 256, 32>}, {pipeline_mode = #tpu.pipeline_mode<synchronous>, transform_indices = @transform_7, window_bounds = array<i64: 1, 32>}, {transform_indices = @transform_8, window_bounds = array<i64: 8, 32>}]} {
    %c0 = arith.constant 0 : index
    %c0_0 = arith.constant 0 : index
    %0 = vector.load %arg1[%c0, %c0_0] : memref<8x256xbf16, #tpu.memory_space<vmem>>, vector<8x256xbf16>
    %c0_1 = arith.constant 0 : index
    %c0_2 = arith.constant 0 : index
    %1 = vector.load %arg3[%c0_1, %c0_2] : memref<256x768xbf16, #tpu.memory_space<vmem>>, vector<256x768xbf16>
    %cst = arith.constant dense<0.000000e+00> : vector<8x768xf32>
    %2 = tpu.matmul %0, %1, %cst {dimension_numbers = #tpu.dot_dimension_numbers<[1], [0], [0], [1], [0, 0, 1, 1], [], []>} : vector<8x256xbf16>, vector<256x768xbf16>, vector<8x768xf32> -> vector<8x768xf32>
    %c0_3 = arith.constant 0 : index
    %c0_4 = arith.constant 0 : index
    %3 = vector.load %arg4[%c0_3, %c0_4] : memref<1x768xf32, #tpu.memory_space<vmem>>, vector<1x768xf32>
    %4 = vector.broadcast %3 : vector<1x768xf32> to vector<8x768xf32>
    %5 = arith.addf %2, %4 : vector<8x768xf32>
    %6 = vector.extract_strided_slice %5 {offsets = [0, 0], sizes = [8, 256], strides = [1, 1]} : vector<8x768xf32> to vector<8x256xf32>
    %7 = vector.extract_strided_slice %5 {offsets = [0, 256], sizes = [8, 256], strides = [1, 1]} : vector<8x768xf32> to vector<8x256xf32>
    %8 = vector.extract_strided_slice %5 {offsets = [0, 512], sizes = [8, 256], strides = [1, 1]} : vector<8x768xf32> to vector<8x256xf32>
    %9 = arith.mulf %6, %7 : vector<8x256xf32>
    %10 = vector.extract_strided_slice %7 {offsets = [0, 32], sizes = [8, 224], strides = [1, 1]} : vector<8x256xf32> to vector<8x224xf32>
    %11 = vector.extract_strided_slice %7 {offsets = [0, 0], sizes = [8, 32], strides = [1, 1]} : vector<8x256xf32> to vector<8x32xf32>
    %12 = tpu.concatenate %10, %11 in 1 : vector<8x224xf32>, vector<8x32xf32> -> vector<8x256xf32>
    %13 = arith.mulf %6, %12 : vector<8x256xf32>
    %14 = vector.extract_strided_slice %7 {offsets = [0, 64], sizes = [8, 192], strides = [1, 1]} : vector<8x256xf32> to vector<8x192xf32>
    %15 = vector.extract_strided_slice %7 {offsets = [0, 0], sizes = [8, 64], strides = [1, 1]} : vector<8x256xf32> to vector<8x64xf32>
    %16 = tpu.concatenate %14, %15 in 1 : vector<8x192xf32>, vector<8x64xf32> -> vector<8x256xf32>
    %17 = arith.mulf %6, %16 : vector<8x256xf32>
    %18 = vector.extract_strided_slice %7 {offsets = [0, 96], sizes = [8, 160], strides = [1, 1]} : vector<8x256xf32> to vector<8x160xf32>
    %19 = vector.extract_strided_slice %7 {offsets = [0, 0], sizes = [8, 96], strides = [1, 1]} : vector<8x256xf32> to vector<8x96xf32>
    %20 = tpu.concatenate %18, %19 in 1 : vector<8x160xf32>, vector<8x96xf32> -> vector<8x256xf32>
    %21 = arith.mulf %6, %20 : vector<8x256xf32>
    %22 = vector.extract_strided_slice %7 {offsets = [0, 128], sizes = [8, 128], strides = [1, 1]} : vector<8x256xf32> to vector<8x128xf32>
    %23 = vector.extract_strided_slice %7 {offsets = [0, 0], sizes = [8, 128], strides = [1, 1]} : vector<8x256xf32> to vector<8x128xf32>
    %24 = tpu.concatenate %22, %23 in 1 : vector<8x128xf32>, vector<8x128xf32> -> vector<8x256xf32>
    %25 = arith.mulf %6, %24 : vector<8x256xf32>
    %26 = vector.extract_strided_slice %7 {offsets = [0, 160], sizes = [8, 96], strides = [1, 1]} : vector<8x256xf32> to vector<8x96xf32>
    %27 = vector.extract_strided_slice %7 {offsets = [0, 0], sizes = [8, 160], strides = [1, 1]} : vector<8x256xf32> to vector<8x160xf32>
    %28 = tpu.concatenate %26, %27 in 1 : vector<8x96xf32>, vector<8x160xf32> -> vector<8x256xf32>
    %29 = arith.mulf %6, %28 : vector<8x256xf32>
    %30 = vector.extract_strided_slice %7 {offsets = [0, 192], sizes = [8, 64], strides = [1, 1]} : vector<8x256xf32> to vector<8x64xf32>
    %31 = vector.extract_strided_slice %7 {offsets = [0, 0], sizes = [8, 192], strides = [1, 1]} : vector<8x256xf32> to vector<8x192xf32>
    %32 = tpu.concatenate %30, %31 in 1 : vector<8x64xf32>, vector<8x192xf32> -> vector<8x256xf32>
    %33 = arith.mulf %6, %32 : vector<8x256xf32>
    %34 = vector.extract_strided_slice %7 {offsets = [0, 224], sizes = [8, 32], strides = [1, 1]} : vector<8x256xf32> to vector<8x32xf32>
    %35 = vector.extract_strided_slice %7 {offsets = [0, 0], sizes = [8, 224], strides = [1, 1]} : vector<8x256xf32> to vector<8x224xf32>
    %36 = tpu.concatenate %34, %35 in 1 : vector<8x32xf32>, vector<8x224xf32> -> vector<8x256xf32>
    %37 = arith.mulf %6, %36 : vector<8x256xf32>
    %38 = tpu.concatenate %9, %13, %17, %21, %25, %29, %33, %37 in 0 : vector<8x256xf32>, vector<8x256xf32>, vector<8x256xf32>, vector<8x256xf32>, vector<8x256xf32>, vector<8x256xf32>, vector<8x256xf32>, vector<8x256xf32> -> vector<64x256xf32>
    %39 = arith.truncf %38 : vector<64x256xf32> to vector<64x256xbf16>
    %c0_5 = arith.constant 0 : index
    %c0_6 = arith.constant 0 : index
    %40 = vector.load %arg5[%c0_5, %c0_6] : memref<256x32xbf16, #tpu.memory_space<vmem>>, vector<256x32xbf16>
    %cst_7 = arith.constant dense<0.000000e+00> : vector<64x32xf32>
    %41 = tpu.matmul %39, %40, %cst_7 {dimension_numbers = #tpu.dot_dimension_numbers<[1], [0], [0], [1], [0, 0, 1, 1], [], []>} : vector<64x256xbf16>, vector<256x32xbf16>, vector<64x32xf32> -> vector<64x32xf32>
    %42 = vector.extract_strided_slice %41 {offsets = [0, 0], sizes = [8, 32], strides = [1, 1]} : vector<64x32xf32> to vector<8x32xf32>
    %43 = vector.extract_strided_slice %41 {offsets = [8, 0], sizes = [8, 32], strides = [1, 1]} : vector<64x32xf32> to vector<8x32xf32>
    %44 = vector.extract_strided_slice %41 {offsets = [16, 0], sizes = [8, 32], strides = [1, 1]} : vector<64x32xf32> to vector<8x32xf32>
    %45 = vector.extract_strided_slice %41 {offsets = [24, 0], sizes = [8, 32], strides = [1, 1]} : vector<64x32xf32> to vector<8x32xf32>
    %46 = vector.extract_strided_slice %41 {offsets = [32, 0], sizes = [8, 32], strides = [1, 1]} : vector<64x32xf32> to vector<8x32xf32>
    %47 = vector.extract_strided_slice %41 {offsets = [40, 0], sizes = [8, 32], strides = [1, 1]} : vector<64x32xf32> to vector<8x32xf32>
    %48 = vector.extract_strided_slice %41 {offsets = [48, 0], sizes = [8, 32], strides = [1, 1]} : vector<64x32xf32> to vector<8x32xf32>
    %49 = vector.extract_strided_slice %41 {offsets = [56, 0], sizes = [8, 32], strides = [1, 1]} : vector<64x32xf32> to vector<8x32xf32>
    %50 = arith.maximumf %42, %43 : vector<8x32xf32>
    %51 = arith.maximumf %50, %44 : vector<8x32xf32>
    %52 = arith.maximumf %51, %45 : vector<8x32xf32>
    %53 = arith.maximumf %52, %46 : vector<8x32xf32>
    %54 = arith.maximumf %53, %47 : vector<8x32xf32>
    %55 = arith.maximumf %54, %48 : vector<8x32xf32>
    %56 = arith.maximumf %55, %49 : vector<8x32xf32>
    %57 = arith.subf %42, %56 : vector<8x32xf32>
    %58 = math.exp %57 : vector<8x32xf32>
    %59 = arith.subf %43, %56 : vector<8x32xf32>
    %60 = math.exp %59 : vector<8x32xf32>
    %61 = arith.subf %44, %56 : vector<8x32xf32>
    %62 = math.exp %61 : vector<8x32xf32>
    %63 = arith.subf %45, %56 : vector<8x32xf32>
    %64 = math.exp %63 : vector<8x32xf32>
    %65 = arith.subf %46, %56 : vector<8x32xf32>
    %66 = math.exp %65 : vector<8x32xf32>
    %67 = arith.subf %47, %56 : vector<8x32xf32>
    %68 = math.exp %67 : vector<8x32xf32>
    %69 = arith.subf %48, %56 : vector<8x32xf32>
    %70 = math.exp %69 : vector<8x32xf32>
    %71 = arith.subf %49, %56 : vector<8x32xf32>
    %72 = math.exp %71 : vector<8x32xf32>
    %73 = arith.addf %58, %60 : vector<8x32xf32>
    %74 = arith.addf %73, %62 : vector<8x32xf32>
    %75 = arith.addf %74, %64 : vector<8x32xf32>
    %76 = arith.addf %75, %66 : vector<8x32xf32>
    %77 = arith.addf %76, %68 : vector<8x32xf32>
    %78 = arith.addf %77, %70 : vector<8x32xf32>
    %79 = arith.addf %78, %72 : vector<8x32xf32>
    %80 = tpu.reciprocal %79 {approx = true} : vector<8x32xf32> -> vector<8x32xf32>
    %81 = arith.mulf %58, %80 : vector<8x32xf32>
    %82 = arith.mulf %60, %80 : vector<8x32xf32>
    %83 = vector.extract_strided_slice %82 {offsets = [0, 28], sizes = [8, 4], strides = [1, 1]} : vector<8x32xf32> to vector<8x4xf32>
    %84 = vector.extract_strided_slice %82 {offsets = [0, 0], sizes = [8, 28], strides = [1, 1]} : vector<8x32xf32> to vector<8x28xf32>
    %85 = tpu.concatenate %83, %84 in 1 : vector<8x4xf32>, vector<8x28xf32> -> vector<8x32xf32>
    %86 = arith.mulf %62, %80 : vector<8x32xf32>
    %87 = vector.extract_strided_slice %86 {offsets = [0, 24], sizes = [8, 8], strides = [1, 1]} : vector<8x32xf32> to vector<8x8xf32>
    %88 = vector.extract_strided_slice %86 {offsets = [0, 0], sizes = [8, 24], strides = [1, 1]} : vector<8x32xf32> to vector<8x24xf32>
    %89 = tpu.concatenate %87, %88 in 1 : vector<8x8xf32>, vector<8x24xf32> -> vector<8x32xf32>
    %90 = arith.mulf %64, %80 : vector<8x32xf32>
    %91 = vector.extract_strided_slice %90 {offsets = [0, 20], sizes = [8, 12], strides = [1, 1]} : vector<8x32xf32> to vector<8x12xf32>
    %92 = vector.extract_strided_slice %90 {offsets = [0, 0], sizes = [8, 20], strides = [1, 1]} : vector<8x32xf32> to vector<8x20xf32>
    %93 = tpu.concatenate %91, %92 in 1 : vector<8x12xf32>, vector<8x20xf32> -> vector<8x32xf32>
    %94 = arith.mulf %66, %80 : vector<8x32xf32>
    %95 = vector.extract_strided_slice %94 {offsets = [0, 16], sizes = [8, 16], strides = [1, 1]} : vector<8x32xf32> to vector<8x16xf32>
    %96 = vector.extract_strided_slice %94 {offsets = [0, 0], sizes = [8, 16], strides = [1, 1]} : vector<8x32xf32> to vector<8x16xf32>
    %97 = tpu.concatenate %95, %96 in 1 : vector<8x16xf32>, vector<8x16xf32> -> vector<8x32xf32>
    %98 = arith.mulf %68, %80 : vector<8x32xf32>
    %99 = vector.extract_strided_slice %98 {offsets = [0, 12], sizes = [8, 20], strides = [1, 1]} : vector<8x32xf32> to vector<8x20xf32>
    %100 = vector.extract_strided_slice %98 {offsets = [0, 0], sizes = [8, 12], strides = [1, 1]} : vector<8x32xf32> to vector<8x12xf32>
    %101 = tpu.concatenate %99, %100 in 1 : vector<8x20xf32>, vector<8x12xf32> -> vector<8x32xf32>
    %102 = arith.mulf %70, %80 : vector<8x32xf32>
    %103 = vector.extract_strided_slice %102 {offsets = [0, 8], sizes = [8, 24], strides = [1, 1]} : vector<8x32xf32> to vector<8x24xf32>
    %104 = vector.extract_strided_slice %102 {offsets = [0, 0], sizes = [8, 8], strides = [1, 1]} : vector<8x32xf32> to vector<8x8xf32>
    %105 = tpu.concatenate %103, %104 in 1 : vector<8x24xf32>, vector<8x8xf32> -> vector<8x32xf32>
    %106 = arith.mulf %72, %80 : vector<8x32xf32>
    %107 = vector.extract_strided_slice %106 {offsets = [0, 4], sizes = [8, 28], strides = [1, 1]} : vector<8x32xf32> to vector<8x28xf32>
    %108 = vector.extract_strided_slice %106 {offsets = [0, 0], sizes = [8, 4], strides = [1, 1]} : vector<8x32xf32> to vector<8x4xf32>
    %109 = tpu.concatenate %107, %108 in 1 : vector<8x28xf32>, vector<8x4xf32> -> vector<8x32xf32>
    %110 = arith.addf %81, %85 : vector<8x32xf32>
    %111 = arith.addf %110, %89 : vector<8x32xf32>
    %112 = arith.addf %111, %93 : vector<8x32xf32>
    %113 = arith.addf %112, %97 : vector<8x32xf32>
    %114 = arith.addf %113, %101 : vector<8x32xf32>
    %115 = arith.addf %114, %105 : vector<8x32xf32>
    %116 = arith.addf %115, %109 : vector<8x32xf32>
    %117 = arith.truncf %116 : vector<8x32xf32> to vector<8x32xbf16>
    %c0_8 = arith.constant 0 : index
    %c0_9 = arith.constant 0 : index
    %118 = vector.load %arg6[%c0_8, %c0_9] : memref<32x256xbf16, #tpu.memory_space<vmem>>, vector<32x256xbf16>
    %cst_10 = arith.constant dense<0.000000e+00> : vector<8x256xf32>
    %119 = tpu.matmul %117, %118, %cst_10 {dimension_numbers = #tpu.dot_dimension_numbers<[1], [0], [0], [1], [0, 0, 1, 1], [], []>} : vector<8x32xbf16>, vector<32x256xbf16>, vector<8x256xf32> -> vector<8x256xf32>
    %120 = arith.mulf %119, %8 : vector<8x256xf32>
    %121 = arith.truncf %120 : vector<8x256xf32> to vector<8x256xbf16>
    %c0_11 = arith.constant 0 : index
    %c0_12 = arith.constant 0 : index
    %122 = vector.load %arg7[%c0_11, %c0_12] : memref<256x32xbf16, #tpu.memory_space<vmem>>, vector<256x32xbf16>
    %cst_13 = arith.constant dense<0.000000e+00> : vector<8x32xf32>
    %123 = tpu.matmul %121, %122, %cst_13 {dimension_numbers = #tpu.dot_dimension_numbers<[1], [0], [0], [1], [0, 0, 1, 1], [], []>} : vector<8x256xbf16>, vector<256x32xbf16>, vector<8x32xf32> -> vector<8x32xf32>
    %c0_14 = arith.constant 0 : index
    %c0_15 = arith.constant 0 : index
    %124 = vector.load %arg8[%c0_14, %c0_15] : memref<1x32xf32, #tpu.memory_space<vmem>>, vector<1x32xf32>
    %125 = vector.broadcast %124 : vector<1x32xf32> to vector<8x32xf32>
    %126 = arith.addf %123, %125 : vector<8x32xf32>
    %c0_16 = arith.constant 0 : index
    %c0_17 = arith.constant 0 : index
    %127 = vector.load %arg2[%c0_16, %c0_17] : memref<8x32xf32, #tpu.memory_space<vmem>>, vector<8x32xf32>
    %cst_18 = arith.constant 5.000000e-01 : f32
    %128 = vector.broadcast %cst_18 : f32 to vector<8x32xf32>
    %129 = arith.mulf %128, %127 : vector<8x32xf32>
    %130 = arith.addf %126, %129 : vector<8x32xf32>
    %c0_19 = arith.constant 0 : index
    %c0_20 = arith.constant 0 : index
    %131 = vector.load %arg9[%c0_19, %c0_20] : memref<8x32xf32, #tpu.memory_space<vmem>>, vector<8x32xf32>
    tpu.vector_store %arg9[%c0_19, %c0_20], %130 {strides = array<i32>} : memref<8x32xf32, #tpu.memory_space<vmem>>, vector<8x32xf32>,
    return
  }
  func.func @transform_0(%arg0: i32) -> (i32, i32) {
    %c0_i32 = arith.constant 0 : i32
    %c0_i32_0 = arith.constant 0 : i32
    return %arg0, %c0_i32 : i32, i32
  }
  func.func @transform_1(%arg0: i32) -> (i32, i32) {
    %c0_i32 = arith.constant 0 : i32
    %c0_i32_0 = arith.constant 0 : i32
    return %arg0, %c0_i32 : i32, i32
  }
  func.func @transform_2(%arg0: i32) -> (i32, i32) {
    %c0_i32 = arith.constant 0 : i32
    %c0_i32_0 = arith.constant 0 : i32
    %c0_i32_1 = arith.constant 0 : i32
    return %c0_i32, %c0_i32_0 : i32, i32
  }
  func.func @transform_3(%arg0: i32) -> (i32, i32) {
    %c0_i32 = arith.constant 0 : i32
    %c0_i32_0 = arith.constant 0 : i32
    %c0_i32_1 = arith.constant 0 : i32
    return %c0_i32, %c0_i32_0 : i32, i32
  }
  func.func @transform_4(%arg0: i32) -> (i32, i32) {
    %c0_i32 = arith.constant 0 : i32
    %c0_i32_0 = arith.constant 0 : i32
    %c0_i32_1 = arith.constant 0 : i32
    return %c0_i32, %c0_i32_0 : i32, i32
  }
  func.func @transform_5(%arg0: i32) -> (i32, i32) {
    %c0_i32 = arith.constant 0 : i32
    %c0_i32_0 = arith.constant 0 : i32
    %c0_i32_1 = arith.constant 0 : i32
    return %c0_i32, %c0_i32_0 : i32, i32
  }
  func.func @transform_6(%arg0: i32) -> (i32, i32) {
    %c0_i32 = arith.constant 0 : i32
    %c0_i32_0 = arith.constant 0 : i32
    %c0_i32_1 = arith.constant 0 : i32
    return %c0_i32, %c0_i32_0 : i32, i32
  }
  func.func @transform_7(%arg0: i32) -> (i32, i32) {
    %c0_i32 = arith.constant 0 : i32
    %c0_i32_0 = arith.constant 0 : i32
    %c0_i32_1 = arith.constant 0 : i32
    return %c0_i32, %c0_i32_0 : i32, i32
  }
  func.func @transform_8(%arg0: i32) -> (i32, i32) {
    %c0_i32 = arith.constant 0 : i32
    %c0_i32_0 = arith.constant 0 : i32
    return %arg0, %c0_i32 : i32, i32
  }
}

</mosaic_0001>

<llo_original>
// kernel: tpu_custom_call.1
$region0: #{tpu_custom_call.1}
  #allocation0 [shape = 'u32[]', space=smem, size = 0x4, offset = 0x4, fixed_abs, tag = 'smem constant byte address 0x4 - core index']
  #allocation1 [shape = 'u32[144,128]{1,0:T(1,128)}', space=vmem, size = 0x12000, scoped, tag = 'internal scratch']
  %s0 = inlined_call_operand.vmem [shape: bf16[8,256], index: 0, kind: input, shape index: {}]
  %s1 = inlined_call_operand.vmem [shape: f32[8,32], index: 1, kind: input, shape index: {}]
  %s2 = inlined_call_operand.hbm [shape: bf16[256,768], index: 2, kind: input, shape index: {}]
  %s3 = inlined_call_operand.vmem [shape: f32[1,768], index: 3, kind: input, shape index: {}]
  %s4 = inlined_call_operand.vmem [shape: bf16[256,32], index: 4, kind: input, shape index: {}]
  %s5 = inlined_call_operand.vmem [shape: bf16[32,256], index: 5, kind: input, shape index: {}]
  %s6 = inlined_call_operand.vmem [shape: bf16[256,32], index: 6, kind: input, shape index: {}]
  %s7 = inlined_call_operand.vmem [shape: f32[1,32], index: 7, kind: input, shape index: {}]
  %s8 = inlined_call_operand.hbm [shape: f32[8,32], index: 8, kind: output, shape index: {}]
  %s9 = sld [smem:[#allocation0]]
  $region46: #{tpu_custom_call.1} parent=0
    _
  %s11 = ssub.s32 1, %s9
  %s12 = scalar_select 0, %s11, %s9
  $region1: #{tpu_custom_call.1} parent=0
    #allocation2 [shape = 'u8[393216]{0}', space=vmem, size = 0x60000, scoped, tag = 'input window, operand 2, single buffered']
    #allocation3 [shape = 's32[1]{0}', space=sflag, size = 0x4, scoped, tag = 'scoped memory for tpu_custom_call.1']
    #allocation4 [shape = 's32[1]{0}', space=sflag, size = 0x4, scoped, tag = 'scoped memory for tpu_custom_call.1']
    #allocation5 [shape = 'u8[4096]{0}', space=vmem, size = 0x1000, scoped, tag = 'output window, operand 0, single buffered']
    %13 = vsyncpa [#allocation3], 0
    %14 = vsyncpa [#allocation4], 0
    // Predicated region
    $region2: #{tpu_custom_call.1} parent=1 // pred_check
      _
    $region3: #{tpu_custom_call.1} parent=1 // pred_check_branch
      %16 = sbr.rel (0) target = $region5
    $region4: #{tpu_custom_call.1} parent=1 // pred_region
      _
    $region5: #{tpu_custom_call.1} parent=1 // pred_fallthru
      _
    // Predicated region
    $region6: #{tpu_custom_call.1} parent=1 // pred_check
      _
    $region7: #{tpu_custom_call.1} parent=1 // pred_check_branch
      %18 = sbr.rel (0) target = $region9
    $region8: #{tpu_custom_call.1} parent=1 // pred_region
      _
    $region9: #{tpu_custom_call.1} parent=1 // pred_fallthru
      _
    // Predicated region
    $region10: #{tpu_custom_call.1} parent=1 // pred_check
      _
    $region11: #{tpu_custom_call.1} parent=1 // pred_check_branch
      %20 = sbr.rel (0) target = $region13
    $region12: #{tpu_custom_call.1} parent=1 // pred_region
      %s22 = ssub.s32 12288, 12288
      %23 = vsyncadd [#allocation3], %s22
      %s24 = sshll.u32 [#allocation2], 4
      %s25 = int_to_ptr.vmem [resolvable:$true] %s24
      %30 = dma.hbm_to_vmem [thread:$0]  %s2, 12288, %s25, [#allocation3], 384, 384, 24
    $region13: #{tpu_custom_call.1} parent=1 // pred_fallthru
      _
    // Predicated region
    $region14: #{tpu_custom_call.1} parent=1 // pred_check
      _
    $region15: #{tpu_custom_call.1} parent=1 // pred_check_branch
      %32 = sbr.rel (0) target = $region17
    $region16: #{tpu_custom_call.1} parent=1 // pred_region
      _
    $region17: #{tpu_custom_call.1} parent=1 // pred_fallthru
      _
    // Predicated region
    $region18: #{tpu_custom_call.1} parent=1 // pred_check
      _
    $region19: #{tpu_custom_call.1} parent=1 // pred_check_branch
      %34 = sbr.rel (0) target = $region21
    $region20: #{tpu_custom_call.1} parent=1 // pred_region
      _
    $region21: #{tpu_custom_call.1} parent=1 // pred_fallthru
      _
    // Predicated region
    $region22: #{tpu_custom_call.1} parent=1 // pred_check
      _
    $region23: #{tpu_custom_call.1} parent=1 // pred_check_branch
      %36 = sbr.rel (0) target = $region25
    $region24: #{tpu_custom_call.1} parent=1 // pred_region
      _
    $region25: #{tpu_custom_call.1} parent=1 // pred_fallthru
      _
    // Predicated region
    $region26: #{tpu_custom_call.1} parent=1 // pred_check
      _
    $region27: #{tpu_custom_call.1} parent=1 // pred_check_branch
      %38 = sbr.rel (0) target = $region29
    $region28: #{tpu_custom_call.1} parent=1 // pred_region
      _
    $region29: #{tpu_custom_call.1} parent=1 // pred_fallthru
      _
    // Predicated region
    $region30: #{tpu_custom_call.1} parent=1 // pred_check
      _
    $region31: #{tpu_custom_call.1} parent=1 // pred_check_branch
      %40 = sbr.rel (0) target = $region33
    $region32: #{tpu_custom_call.1} parent=1 // pred_region
      _
    $region33: #{tpu_custom_call.1} parent=1 // pred_fallthru
      _
    // Predicated region
    $region34: #{tpu_custom_call.1} parent=1 // pred_check
      _
    $region35: #{tpu_custom_call.1} parent=1 // pred_check_branch
      %42 = sbr.rel (0) target = $region37
    $region36: #{tpu_custom_call.1} parent=1 // pred_region
      %43 = dma.done [#allocation3], 12288
    $region37: #{tpu_custom_call.1} parent=1 // pred_fallthru
      _
    %v45 = vld [vmem:[%s0] sm:$0xff]
    %v46 = vld [vmem:[#allocation2] sm:$0xff]
    %v47 = vld [vmem:[#allocation2 + $0x8] sm:$0xff]
    %v48 = vld [vmem:[#allocation2 + $0x10] sm:$0xff]
    %v49 = vld [vmem:[#allocation2 + $0x18] sm:$0xff]
    %v50 = vld [vmem:[#allocation2 + $0x20] sm:$0xff]
    %v51 = vld [vmem:[#allocation2 + $0x28] sm:$0xff]
    %v52 = vld [vmem:[#allocation2 + $0x30] sm:$0xff]
    %v53 = vld [vmem:[#allocation2 + $0x38] sm:$0xff]
    %v54 = vld [vmem:[#allocation2 + $0x40] sm:$0xff]
    %v55 = vld [vmem:[#allocation2 + $0x48] sm:$0xff]
    %v56 = vld [vmem:[#allocation2 + $0x50] sm:$0xff]
    %v57 = vld [vmem:[#allocation2 + $0x58] sm:$0xff]
    %v58 = vld [vmem:[#allocation2 + $0x60] sm:$0xff]
    %v59 = vld [vmem:[#allocation2 + $0x68] sm:$0xff]
    %v60 = vld [vmem:[#allocation2 + $0x70] sm:$0xff]
    %v61 = vld [vmem:[#allocation2 + $0x78] sm:$0xff]
    %v62 = vld [vmem:[#allocation2 + $0x80] sm:$0xff]
    %v63 = vld [vmem:[#allocation2 + $0x88] sm:$0xff]
    %v64 = vld [vmem:[#allocation2 + $0x90] sm:$0xff]
    %v65 = vld [vmem:[#allocation2 + $0x98] sm:$0xff]
    %v66 = vld [vmem:[#allocation2 + $0xa0] sm:$0xff]
    %v67 = vld [vmem:[#allocation2 + $0xa8] sm:$0xff]
    %v68 = vld [vmem:[#allocation2 + $0xb0] sm:$0xff]
    %v69 = vld [vmem:[#allocation2 + $0xb8] sm:$0xff]
    %v70 = vld [vmem:[#allocation2 + $0xc0] sm:$0xff]
    %v71 = vld [vmem:[#allocation2 + $0xc8] sm:$0xff]
    %v72 = vld [vmem:[#allocation2 + $0xd0] sm:$0xff]
    %v73 = vld [vmem:[#allocation2 + $0xd8] sm:$0xff]
    %v74 = vld [vmem:[#allocation2 + $0xe0] sm:$0xff]
    %v75 = vld [vmem:[#allocation2 + $0xe8] sm:$0xff]
    %v76 = vld [vmem:[#allocation2 + $0xf0] sm:$0xff]
    %v77 = vld [vmem:[#allocation2 + $0xf8] sm:$0xff]
    %v78 = vld [vmem:[#allocation2 + $0x100] sm:$0xff]
    %v79 = vld [vmem:[#allocation2 + $0x108] sm:$0xff]
    %v80 = vld [vmem:[#allocation2 + $0x110] sm:$0xff]
    %v81 = vld [vmem:[#allocation2 + $0x118] sm:$0xff]
    %v82 = vld [vmem:[#allocation2 + $0x120] sm:$0xff]
    %v83 = vld [vmem:[#allocation2 + $0x128] sm:$0xff]
    %v84 = vld [vmem:[#allocation2 + $0x130] sm:$0xff]
    %v85 = vld [vmem:[#allocation2 + $0x138] sm:$0xff]
    %v86 = vld [vmem:[#allocation2 + $0x140] sm:$0xff]
    %v87 = vld [vmem:[#allocation2 + $0x148] sm:$0xff]
    %v88 = vld [vmem:[#allocation2 + $0x150] sm:$0xff]
    %v89 = vld [vmem:[#allocation2 + $0x158] sm:$0xff]
    %v90 = vld [vmem:[#allocation2 + $0x160] sm:$0xff]
    %v91 = vld [vmem:[#allocation2 + $0x168] sm:$0xff]
    %v92 = vld [vmem:[#allocation2 + $0x170] sm:$0xff]
    %v93 = vld [vmem:[#allocation2 + $0x178] sm:$0xff]
    %v94 = vld [vmem:[#allocation2 + $0x180] sm:$0xff]
    %v95 = vld [vmem:[#allocation2 + $0x188] sm:$0xff]
    %v96 = vld [vmem:[#allocation2 + $0x190] sm:$0xff]
    %v97 = vld [vmem:[#allocation2 + $0x198] sm:$0xff]
    %v98 = vld [vmem:[#allocation2 + $0x1a0] sm:$0xff]
    %v99 = vld [vmem:[#allocation2 + $0x1a8] sm:$0xff]
    %v100 = vld [vmem:[#allocation2 + $0x1b0] sm:$0xff]
    %v101 = vld [vmem:[#allocation2 + $0x1b8] sm:$0xff]
    %v102 = vld [vmem:[#allocation2 + $0x1c0] sm:$0xff]
    %v103 = vld [vmem:[#allocation2 + $0x1c8] sm:$0xff]
    %v104 = vld [vmem:[#allocation2 + $0x1d0] sm:$0xff]
    %v105 = vld [vmem:[#allocation2 + $0x1d8] sm:$0xff]
    %v106 = vld [vmem:[#allocation2 + $0x1e0] sm:$0xff]
    %v107 = vld [vmem:[#allocation2 + $0x1e8] sm:$0xff]
    %v108 = vld [vmem:[#allocation2 + $0x1f0] sm:$0xff]
    %v109 = vld [vmem:[#allocation2 + $0x1f8] sm:$0xff]
    %v110 = vld [vmem:[#allocation2 + $0x200] sm:$0xff]
    %v111 = vld [vmem:[#allocation2 + $0x208] sm:$0xff]
    %v112 = vld [vmem:[#allocation2 + $0x210] sm:$0xff]
    %v113 = vld [vmem:[#allocation2 + $0x218] sm:$0xff]
    %v114 = vld [vmem:[#allocation2 + $0x220] sm:$0xff]
    %v115 = vld [vmem:[#allocation2 + $0x228] sm:$0xff]
    %v116 = vld [vmem:[#allocation2 + $0x230] sm:$0xff]
    %v117 = vld [vmem:[#allocation2 + $0x238] sm:$0xff]
    %v118 = vld [vmem:[#allocation2 + $0x240] sm:$0xff]
    %v119 = vld [vmem:[#allocation2 + $0x248] sm:$0xff]
    %v120 = vld [vmem:[#allocation2 + $0x250] sm:$0xff]
    %v121 = vld [vmem:[#allocation2 + $0x258] sm:$0xff]
    %v122 = vld [vmem:[#allocation2 + $0x260] sm:$0xff]
    %v123 = vld [vmem:[#allocation2 + $0x268] sm:$0xff]
    %v124 = vld [vmem:[#allocation2 + $0x270] sm:$0xff]
    %v125 = vld [vmem:[#allocation2 + $0x278] sm:$0xff]
    %v126 = vld [vmem:[#allocation2 + $0x280] sm:$0xff]
    %v127 = vld [vmem:[#allocation2 + $0x288] sm:$0xff]
    %v128 = vld [vmem:[#allocation2 + $0x290] sm:$0xff]
    %v129 = vld [vmem:[#allocation2 + $0x298] sm:$0xff]
    %v130 = vld [vmem:[#allocation2 + $0x2a0] sm:$0xff]
    %v131 = vld [vmem:[#allocation2 + $0x2a8] sm:$0xff]
    %v132 = vld [vmem:[#allocation2 + $0x2b0] sm:$0xff]
    %v133 = vld [vmem:[#allocation2 + $0x2b8] sm:$0xff]
    %v134 = vld [vmem:[#allocation2 + $0x2c0] sm:$0xff]
    %v135 = vld [vmem:[#allocation2 + $0x2c8] sm:$0xff]
    %v136 = vld [vmem:[#allocation2 + $0x2d0] sm:$0xff]
    %v137 = vld [vmem:[#allocation2 + $0x2d8] sm:$0xff]
    %v138 = vld [vmem:[#allocation2 + $0x2e0] sm:$0xff]
    %v139 = vld [vmem:[#allocation2 + $0x2e8] sm:$0xff]
    %v140 = vld [vmem:[#allocation2 + $0x2f0] sm:$0xff]
    %v141 = vld [vmem:[#allocation2 + $0x2f8] sm:$0xff]
    %v142 = vld [vmem:[%s3] sm:$0x3f]
    %v144 = vlaneseq
    %v145 = vshrl.u32 %v144, 7
    %v146 = vsub.s32 0, %v145
    %v147 = vrot.slane %v142, %v146
    %v148 = vlaneseq
    %v149 = vshrl.u32 %v148, 7
    %v150 = vsub.s32 1, %v149
    %v151 = vrot.slane %v142, %v150
    %v152 = vlaneseq
    %v153 = vshrl.u32 %v152, 7
    %v154 = vsub.s32 2, %v153
    %v155 = vrot.slane %v142, %v154
    %v156 = vlaneseq
    %v157 = vshrl.u32 %v156, 7
    %v158 = vsub.s32 3, %v157
    %v159 = vrot.slane %v142, %v158
    %v160 = vlaneseq
    %v161 = vshrl.u32 %v160, 7
    %v162 = vsub.s32 4, %v161
    %v163 = vrot.slane %v142, %v162
    %v164 = vlaneseq
    %v165 = vshrl.u32 %v164, 7
    %v166 = vsub.s32 5, %v165
    %v167 = vrot.slane %v142, %v166
    %v175 = vunpack.c.l.b16 %v45
    %v176 = vunpack.c.h.b16 %v45
    %v177 = vpack.c.b16 %v175, %v175
    %v178 = vpack.c.b16 %v176, %v176
    %v277 = vunpack.c.l.b16 %v46
    %v278 = vunpack.c.h.b16 %v46
    %v279 = vunpack.c.l.b16 %v47
    %v280 = vunpack.c.h.b16 %v47
    %v281 = vunpack.c.l.b16 %v48
    %v282 = vunpack.c.h.b16 %v48
    %v283 = vunpack.c.l.b16 %v49
    %v284 = vunpack.c.h.b16 %v49
    %v285 = vunpack.c.l.b16 %v50
    %v286 = vunpack.c.h.b16 %v50
    %v287 = vunpack.c.l.b16 %v51
    %v288 = vunpack.c.h.b16 %v51
    %v289 = vunpack.c.l.b16 %v52
    %v290 = vunpack.c.h.b16 %v52
    %v291 = vunpack.c.l.b16 %v53
    %v292 = vunpack.c.h.b16 %v53
    %v293 = vunpack.c.l.b16 %v54
    %v294 = vunpack.c.h.b16 %v54
    %v295 = vunpack.c.l.b16 %v55
    %v296 = vunpack.c.h.b16 %v55
    %v297 = vunpack.c.l.b16 %v56
    %v298 = vunpack.c.h.b16 %v56
    %v299 = vunpack.c.l.b16 %v57
    %v300 = vunpack.c.h.b16 %v57
    %v301 = vunpack.c.l.b16 %v58
    %v302 = vunpack.c.h.b16 %v58
    %v303 = vunpack.c.l.b16 %v59
    %v304 = vunpack.c.h.b16 %v59
    %v305 = vunpack.c.l.b16 %v60
    %v306 = vunpack.c.h.b16 %v60
    %v307 = vunpack.c.l.b16 %v61
    %v308 = vunpack.c.h.b16 %v61
    %v309 = vunpack.c.l.b16 %v62
    %v310 = vunpack.c.h.b16 %v62
    %v311 = vunpack.c.l.b16 %v63
    %v312 = vunpack.c.h.b16 %v63
    %v313 = vunpack.c.l.b16 %v64
    %v314 = vunpack.c.h.b16 %v64
    %v315 = vunpack.c.l.b16 %v65
    %v316 = vunpack.c.h.b16 %v65
    %v317 = vunpack.c.l.b16 %v66
    %v318 = vunpack.c.h.b16 %v66
    %v319 = vunpack.c.l.b16 %v67
    %v320 = vunpack.c.h.b16 %v67
    %v321 = vunpack.c.l.b16 %v68
    %v322 = vunpack.c.h.b16 %v68
    %v323 = vunpack.c.l.b16 %v69
    %v324 = vunpack.c.h.b16 %v69
    %v325 = vunpack.c.l.b16 %v70
    %v326 = vunpack.c.h.b16 %v70
    %v327 = vunpack.c.l.b16 %v71
    %v328 = vunpack.c.h.b16 %v71
    %v329 = vunpack.c.l.b16 %v72
    %v330 = vunpack.c.h.b16 %v72
    %v331 = vunpack.c.l.b16 %v73
    %v332 = vunpack.c.h.b16 %v73
    %v333 = vunpack.c.l.b16 %v74
    %v334 = vunpack.c.h.b16 %v74
    %v335 = vunpack.c.l.b16 %v75
    %v336 = vunpack.c.h.b16 %v75
    %v337 = vunpack.c.l.b16 %v76
    %v338 = vunpack.c.h.b16 %v76
    %v339 = vunpack.c.l.b16 %v77
    %v340 = vunpack.c.h.b16 %v77
    %v341 = vunpack.c.l.b16 %v78
    %v342 = vunpack.c.h.b16 %v78
    %v343 = vunpack.c.l.b16 %v79
    %v344 = vunpack.c.h.b16 %v79
    %v345 = vunpack.c.l.b16 %v80
    %v346 = vunpack.c.h.b16 %v80
    %v347 = vunpack.c.l.b16 %v81
    %v348 = vunpack.c.h.b16 %v81
    %v349 = vunpack.c.l.b16 %v82
    %v350 = vunpack.c.h.b16 %v82
    %v351 = vunpack.c.l.b16 %v83
    %v352 = vunpack.c.h.b16 %v83
    %v353 = vunpack.c.l.b16 %v84
    %v354 = vunpack.c.h.b16 %v84
    %v355 = vunpack.c.l.b16 %v85
    %v356 = vunpack.c.h.b16 %v85
    %v357 = vunpack.c.l.b16 %v86
    %v358 = vunpack.c.h.b16 %v86
    %v359 = vunpack.c.l.b16 %v87
    %v360 = vunpack.c.h.b16 %v87
    %v361 = vunpack.c.l.b16 %v88
    %v362 = vunpack.c.h.b16 %v88
    %v363 = vunpack.c.l.b16 %v89
    %v364 = vunpack.c.h.b16 %v89
    %v365 = vunpack.c.l.b16 %v90
    %v366 = vunpack.c.h.b16 %v90
    %v367 = vunpack.c.l.b16 %v91
    %v368 = vunpack.c.h.b16 %v91
    %v369 = vunpack.c.l.b16 %v92
    %v370 = vunpack.c.h.b16 %v92
    %v371 = vunpack.c.l.b16 %v93
    %v372 = vunpack.c.h.b16 %v93
    %v373 = vunpack.c.l.b16 %v94
    %v374 = vunpack.c.h.b16 %v94
    %v375 = vunpack.c.l.b16 %v95
    %v376 = vunpack.c.h.b16 %v95
    %v377 = vunpack.c.l.b16 %v96
    %v378 = vunpack.c.h.b16 %v96
    %v379 = vunpack.c.l.b16 %v97
    %v380 = vunpack.c.h.b16 %v97
    %v381 = vunpack.c.l.b16 %v98
    %v382 = vunpack.c.h.b16 %v98
    %v383 = vunpack.c.l.b16 %v99
    %v384 = vunpack.c.h.b16 %v99
    %v385 = vunpack.c.l.b16 %v100
    %v386 = vunpack.c.h.b16 %v100
    %v387 = vunpack.c.l.b16 %v101
    %v388 = vunpack.c.h.b16 %v101
    %v389 = vunpack.c.l.b16 %v102
    %v390 = vunpack.c.h.b16 %v102
    %v391 = vunpack.c.l.b16 %v103
    %v392 = vunpack.c.h.b16 %v103
    %v393 = vunpack.c.l.b16 %v104
    %v394 = vunpack.c.h.b16 %v104
    %v395 = vunpack.c.l.b16 %v105
    %v396 = vunpack.c.h.b16 %v105
    %v397 = vunpack.c.l.b16 %v106
    %v398 = vunpack.c.h.b16 %v106
    %v399 = vunpack.c.l.b16 %v107
    %v400 = vunpack.c.h.b16 %v107
    %v401 = vunpack.c.l.b16 %v108
    %v402 = vunpack.c.h.b16 %v108
    %v403 = vunpack.c.l.b16 %v109
    %v404 = vunpack.c.h.b16 %v109
    %v405 = vunpack.c.l.b16 %v110
    %v406 = vunpack.c.h.b16 %v110
    %v407 = vunpack.c.l.b16 %v111
    %v408 = vunpack.c.h.b16 %v111
    %v409 = vunpack.c.l.b16 %v112
    %v410 = vunpack.c.h.b16 %v112
    %v411 = vunpack.c.l.b16 %v113
    %v412 = vunpack.c.h.b16 %v113
    %v413 = vunpack.c.l.b16 %v114
    %v414 = vunpack.c.h.b16 %v114
    %v415 = vunpack.c.l.b16 %v115
    %v416 = vunpack.c.h.b16 %v115
    %v417 = vunpack.c.l.b16 %v116
    %v418 = vunpack.c.h.b16 %v116
    %v419 = vunpack.c.l.b16 %v117
    %v420 = vunpack.c.h.b16 %v117
    %v421 = vunpack.c.l.b16 %v118
    %v422 = vunpack.c.h.b16 %v118
    %v423 = vunpack.c.l.b16 %v119
    %v424 = vunpack.c.h.b16 %v119
    %v425 = vunpack.c.l.b16 %v120
    %v426 = vunpack.c.h.b16 %v120
    %v427 = vunpack.c.l.b16 %v121
    %v428 = vunpack.c.h.b16 %v121
    %v429 = vunpack.c.l.b16 %v122
    %v430 = vunpack.c.h.b16 %v122
    %v431 = vunpack.c.l.b16 %v123
    %v432 = vunpack.c.h.b16 %v123
    %v433 = vunpack.c.l.b16 %v124
    %v434 = vunpack.c.h.b16 %v124
    %v435 = vunpack.c.l.b16 %v125
    %v436 = vunpack.c.h.b16 %v125
    %v437 = vunpack.c.l.b16 %v126
    %v438 = vunpack.c.h.b16 %v126
    %v439 = vunpack.c.l.b16 %v127
    %v440 = vunpack.c.h.b16 %v127
    %v441 = vunpack.c.l.b16 %v128
    %v442 = vunpack.c.h.b16 %v128
    %v443 = vunpack.c.l.b16 %v129
    %v444 = vunpack.c.h.b16 %v129
    %v445 = vunpack.c.l.b16 %v130
    %v446 = vunpack.c.h.b16 %v130
    %v447 = vunpack.c.l.b16 %v131
    %v448 = vunpack.c.h.b16 %v131
    %v449 = vunpack.c.l.b16 %v132
    %v450 = vunpack.c.h.b16 %v132
    %v451 = vunpack.c.l.b16 %v133
    %v452 = vunpack.c.h.b16 %v133
    %v453 = vunpack.c.l.b16 %v134
    %v454 = vunpack.c.h.b16 %v134
    %v455 = vunpack.c.l.b16 %v135
    %v456 = vunpack.c.h.b16 %v135
    %v457 = vunpack.c.l.b16 %v136
    %v458 = vunpack.c.h.b16 %v136
    %v459 = vunpack.c.l.b16 %v137
    %v460 = vunpack.c.h.b16 %v137
    %v461 = vunpack.c.l.b16 %v138
    %v462 = vunpack.c.h.b16 %v138
    %v463 = vunpack.c.l.b16 %v139
    %v464 = vunpack.c.h.b16 %v139
    %v465 = vunpack.c.l.b16 %v140
    %v466 = vunpack.c.h.b16 %v140
    %v467 = vunpack.c.l.b16 %v141
    %v468 = vunpack.c.h.b16 %v141
    %v469 = vpack.c.b16 %v283, %v277
    %v470 = vpack.c.b16 %v284, %v278
    %v471 = vpack.c.b16 %v285, %v279
    %v472 = vpack.c.b16 %v286, %v280
    %v473 = vpack.c.b16 %v287, %v281
    %v474 = vpack.c.b16 %v288, %v282
    %v475 = vpack.c.b16 %v295, %v289
    %v476 = vpack.c.b16 %v296, %v290
    %v477 = vpack.c.b16 %v297, %v291
    %v478 = vpack.c.b16 %v298, %v292
    %v479 = vpack.c.b16 %v299, %v293
    %v480 = vpack.c.b16 %v300, %v294
    %v481 = vpack.c.b16 %v307, %v301
    %v482 = vpack.c.b16 %v308, %v302
    %v483 = vpack.c.b16 %v309, %v303
    %v484 = vpack.c.b16 %v310, %v304
    %v485 = vpack.c.b16 %v311, %v305
    %v486 = vpack.c.b16 %v312, %v306
    %v487 = vpack.c.b16 %v319, %v313
    %v488 = vpack.c.b16 %v320, %v314
    %v489 = vpack.c.b16 %v321, %v315
    %v490 = vpack.c.b16 %v322, %v316
    %v491 = vpack.c.b16 %v323, %v317
    %v492 = vpack.c.b16 %v324, %v318
    %v493 = vpack.c.b16 %v331, %v325
    %v494 = vpack.c.b16 %v332, %v326
    %v495 = vpack.c.b16 %v333, %v327
    %v496 = vpack.c.b16 %v334, %v328
    %v497 = vpack.c.b16 %v335, %v329
    %v498 = vpack.c.b16 %v336, %v330
    %v499 = vpack.c.b16 %v343, %v337
    %v500 = vpack.c.b16 %v344, %v338
    %v501 = vpack.c.b16 %v345, %v339
    %v502 = vpack.c.b16 %v346, %v340
    %v503 = vpack.c.b16 %v347, %v341
    %v504 = vpack.c.b16 %v348, %v342
    %v505 = vpack.c.b16 %v355, %v349
    %v506 = vpack.c.b16 %v356, %v350
    %v507 = vpack.c.b16 %v357, %v351
    %v508 = vpack.c.b16 %v358, %v352
    %v509 = vpack.c.b16 %v359, %v353
    %v510 = vpack.c.b16 %v360, %v354
    %v511 = vpack.c.b16 %v367, %v361
    %v512 = vpack.c.b16 %v368, %v362
    %v513 = vpack.c.b16 %v369, %v363
    %v514 = vpack.c.b16 %v370, %v364
    %v515 = vpack.c.b16 %v371, %v365
    %v516 = vpack.c.b16 %v372, %v366
    %v517 = vpack.c.b16 %v379, %v373
    %v518 = vpack.c.b16 %v380, %v374
    %v519 = vpack.c.b16 %v381, %v375
    %v520 = vpack.c.b16 %v382, %v376
    %v521 = vpack.c.b16 %v383, %v377
    %v522 = vpack.c.b16 %v384, %v378
    %v523 = vpack.c.b16 %v391, %v385
    %v524 = vpack.c.b16 %v392, %v386
    %v525 = vpack.c.b16 %v393, %v387
    %v526 = vpack.c.b16 %v394, %v388
    %v527 = vpack.c.b16 %v395, %v389
    %v528 = vpack.c.b16 %v396, %v390
    %v529 = vpack.c.b16 %v403, %v397
    %v530 = vpack.c.b16 %v404, %v398
    %v531 = vpack.c.b16 %v405, %v399
    %v532 = vpack.c.b16 %v406, %v400
    %v533 = vpack.c.b16 %v407, %v401
    %v534 = vpack.c.b16 %v408, %v402
    %v535 = vpack.c.b16 %v415, %v409
    %v536 = vpack.c.b16 %v416, %v410
    %v537 = vpack.c.b16 %v417, %v411
    %v538 = vpack.c.b16 %v418, %v412
    %v539 = vpack.c.b16 %v419, %v413
    %v540 = vpack.c.b16 %v420, %v414
    %v541 = vpack.c.b16 %v427, %v421
    %v542 = vpack.c.b16 %v428, %v422
    %v543 = vpack.c.b16 %v429, %v423
    %v544 = vpack.c.b16 %v430, %v424
    %v545 = vpack.c.b16 %v431, %v425
    %v546 = vpack.c.b16 %v432, %v426
    %v547 = vpack.c.b16 %v439, %v433
    %v548 = vpack.c.b16 %v440, %v434
    %v549 = vpack.c.b16 %v441, %v435
    %v550 = vpack.c.b16 %v442, %v436
    %v551 = vpack.c.b16 %v443, %v437
    %v552 = vpack.c.b16 %v444, %v438
    %v553 = vpack.c.b16 %v451, %v445
    %v554 = vpack.c.b16 %v452, %v446
    %v555 = vpack.c.b16 %v453, %v447
    %v556 = vpack.c.b16 %v454, %v448
    %v557 = vpack.c.b16 %v455, %v449
    %v558 = vpack.c.b16 %v456, %v450
    %v559 = vpack.c.b16 %v463, %v457
    %v560 = vpack.c.b16 %v464, %v458
    %v561 = vpack.c.b16 %v465, %v459
    %v562 = vpack.c.b16 %v466, %v460
    %v563 = vpack.c.b16 %v467, %v461
    %v564 = vpack.c.b16 %v468, %v462
    %661 = vmatprep.subr.bf16.mxu0 %v512
    %662 = vmatpush1.bf16.msra.mxu0 %v511
    %663 = vmatprep.subr.bf16.mxu0 %v506
    %664 = vmatpush1.bf16.msra.mxu0 %v505
    %665 = vmatprep.subr.bf16.mxu0 %v500
    %666 = vmatpush1.bf16.msra.mxu0 %v499
    %667 = vmatprep.subr.bf16.mxu0 %v494
    %668 = vmatpush1.bf16.msra.mxu0 %v493
    %669 = vmatprep.subr.bf16.mxu0 %v488
    %670 = vmatpush1.bf16.msra.mxu0 %v487
    %671 = vmatprep.subr.bf16.mxu0 %v482
    %672 = vmatpush1.bf16.msra.mxu0 %v481
    %673 = vmatprep.subr.bf16.mxu0 %v476
    %674 = vmatpush1.bf16.msra.mxu0 %v475
    %675 = vmatprep.subr.bf16.mxu0 %v470
    %676 = vmatpush1.bf16.msra.mxu0 %v469
    %677 = vmatprep.subr.bf16.mxu0 %v560
    %678 = vmatpush2.bf16.msra.mxu0 %v559
    %679 = vmatprep.subr.bf16.mxu0 %v554
    %680 = vmatpush2.bf16.msra.mxu0 %v553
    %681 = vmatprep.subr.bf16.mxu0 %v548
    %682 = vmatpush2.bf16.msra.mxu0 %v547
    %683 = vmatprep.subr.bf16.mxu0 %v542
    %684 = vmatpush2.bf16.msra.mxu0 %v541
    %685 = vmatprep.subr.bf16.mxu0 %v536
    %686 = vmatpush2.bf16.msra.mxu0 %v535
    %687 = vmatprep.subr.bf16.mxu0 %v530
    %688 = vmatpush2.bf16.msra.mxu0 %v529
    %689 = vmatprep.subr.bf16.mxu0 %v524
    %690 = vmatpush2.bf16.msra.mxu0 %v523
    %691 = vmatprep.subr.bf16.mxu0 %v518
    %692 = vmatpush2.bf16.msra.mxu0 %v517
    %693 = vmatprep.mubr.bf16.mxu0 %v178
    %694 = vmatmul.mubr.bf16.gmra.mxu0 %v177
    %v695 = vpop.f32.mrf.mxu0
    %v696 = vadd.f32 %v147, %v695
    %v697 = vpop.f32.mrf.mxu0
    %v698 = vadd.f32 %v151, %v697
    %v699 = vpop.f32.mrf.mxu0
    %v700 = vpop.f32.mrf.mxu0
    %701 = vdwg.mxu0
    %702 = vmatprep.subr.bf16.mxu0 %v514
    %703 = vmatpush1.bf16.msra.mxu0 %v513
    %704 = vmatprep.subr.bf16.mxu0 %v508
    %705 = vmatpush1.bf16.msra.mxu0 %v507
    %706 = vmatprep.subr.bf16.mxu0 %v502
    %707 = vmatpush1.bf16.msra.mxu0 %v501
    %708 = vmatprep.subr.bf16.mxu0 %v496
    %709 = vmatpush1.bf16.msra.mxu0 %v495
    %710 = vmatprep.subr.bf16.mxu0 %v490
    %711 = vmatpush1.bf16.msra.mxu0 %v489
    %712 = vmatprep.subr.bf16.mxu0 %v484
    %713 = vmatpush1.bf16.msra.mxu0 %v483
    %714 = vmatprep.subr.bf16.mxu0 %v478
    %715 = vmatpush1.bf16.msra.mxu0 %v477
    %716 = vmatprep.subr.bf16.mxu0 %v472
    %717 = vmatpush1.bf16.msra.mxu0 %v471
    %718 = vmatprep.subr.bf16.mxu0 %v562
    %719 = vmatpush2.bf16.msra.mxu0 %v561
    %720 = vmatprep.subr.bf16.mxu0 %v556
    %721 = vmatpush2.bf16.msra.mxu0 %v555
    %722 = vmatprep.subr.bf16.mxu0 %v550
    %723 = vmatpush2.bf16.msra.mxu0 %v549
    %724 = vmatprep.subr.bf16.mxu0 %v544
    %725 = vmatpush2.bf16.msra.mxu0 %v543
    %726 = vmatprep.subr.bf16.mxu0 %v538
    %727 = vmatpush2.bf16.msra.mxu0 %v537
    %728 = vmatprep.subr.bf16.mxu0 %v532
    %729 = vmatpush2.bf16.msra.mxu0 %v531
    %730 = vmatprep.subr.bf16.mxu0 %v526
    %731 = vmatpush2.bf16.msra.mxu0 %v525
    %732 = vmatprep.subr.bf16.mxu0 %v520
    %733 = vmatpush2.bf16.msra.mxu0 %v519
    %734 = vmatprep.mubr.bf16.mxu0 %v178
    %735 = vmatmul.mubr.bf16.gmra.mxu0 %v177
    %v736 = vpop.f32.mrf.mxu0
    %v737 = vadd.f32 %v155, %v736
    %v738 = vpop.f32.mrf.mxu0
    %v739 = vadd.f32 %v159, %v738
    %v740 = vpop.f32.mrf.mxu0
    %v741 = vpop.f32.mrf.mxu0
    %742 = vdwg.mxu0
    %743 = vmatprep.subr.bf16.mxu0 %v516
    %744 = vmatpush1.bf16.msra.mxu0 %v515
    %745 = vmatprep.subr.bf16.mxu0 %v510
    %746 = vmatpush1.bf16.msra.mxu0 %v509
    %747 = vmatprep.subr.bf16.mxu0 %v504
    %748 = vmatpush1.bf16.msra.mxu0 %v503
    %749 = vmatprep.subr.bf16.mxu0 %v498
    %750 = vmatpush1.bf16.msra.mxu0 %v497
    %751 = vmatprep.subr.bf16.mxu0 %v492
    %752 = vmatpush1.bf16.msra.mxu0 %v491
    %753 = vmatprep.subr.bf16.mxu0 %v486
    %754 = vmatpush1.bf16.msra.mxu0 %v485
    %755 = vmatprep.subr.bf16.mxu0 %v480
    %756 = vmatpush1.bf16.msra.mxu0 %v479
    %757 = vmatprep.subr.bf16.mxu0 %v474
    %758 = vmatpush1.bf16.msra.mxu0 %v473
    %759 = vmatprep.subr.bf16.mxu0 %v564
    %760 = vmatpush2.bf16.msra.mxu0 %v563
    %761 = vmatprep.subr.bf16.mxu0 %v558
    %762 = vmatpush2.bf16.msra.mxu0 %v557
    %763 = vmatprep.subr.bf16.mxu0 %v552
    %764 = vmatpush2.bf16.msra.mxu0 %v551
    %765 = vmatprep.subr.bf16.mxu0 %v546
    %766 = vmatpush2.bf16.msra.mxu0 %v545
    %767 = vmatprep.subr.bf16.mxu0 %v540
    %768 = vmatpush2.bf16.msra.mxu0 %v539
    %769 = vmatprep.subr.bf16.mxu0 %v534
    %770 = vmatpush2.bf16.msra.mxu0 %v533
    %771 = vmatprep.subr.bf16.mxu0 %v528
    %772 = vmatpush2.bf16.msra.mxu0 %v527
    %773 = vmatprep.subr.bf16.mxu0 %v522
    %774 = vmatpush2.bf16.msra.mxu0 %v521
    %775 = vmatprep.mubr.bf16.mxu0 %v178
    %776 = vmatmul.mubr.bf16.gmra.mxu0 %v177
    %v777 = vpop.f32.mrf.mxu0
    %v778 = vadd.f32 %v163, %v777
    %v779 = vpop.f32.mrf.mxu0
    %v780 = vadd.f32 %v167, %v779
    %v781 = vpop.f32.mrf.mxu0
    %v782 = vpop.f32.mrf.mxu0
    %783 = vdwg.mxu0
    %v784 = vmul.f32 %v696, %v737
    %v785 = vmul.f32 %v698, %v739
    %788 = vrot.lane.b32.xlu0 %v737, 96
    %v789 = vpop.permute.xlu0 %788
    %790 = vrot.lane.b32.xlu0 %v739, 96
    %v791 = vpop.permute.xlu0 %790
    %vm792 = vcmask 785408
    %v793 = vsel %vm792, %v789, %v791
    %v797 = vsel %vm792, %v791, %v789
    %v798 = vmul.f32 %v696, %v793
    %v799 = vmul.f32 %v698, %v797
    %800 = vrot.lane.b32.xlu0 %v737, 64
    %v801 = vpop.permute.xlu0 %800
    %802 = vrot.lane.b32.xlu0 %v739, 64
    %v803 = vpop.permute.xlu0 %802
    %vm804 = vcmask 523264
    %v805 = vsel %vm804, %v801, %v803
    %v809 = vsel %vm804, %v803, %v801
    %v810 = vmul.f32 %v696, %v805
    %v811 = vmul.f32 %v698, %v809
    %812 = vrot.lane.b32.xlu0 %v737, 32
    %v813 = vpop.permute.xlu0 %812
    %814 = vrot.lane.b32.xlu0 %v739, 32
    %v815 = vpop.permute.xlu0 %814
    %vm816 = vcmask 261120
    %v817 = vsel %vm816, %v813, %v815
    %v821 = vsel %vm816, %v815, %v813
    %v822 = vmul.f32 %v696, %v817
    %v823 = vmul.f32 %v698, %v821
    %v824 = vmul.f32 %v696, %v739
    %v825 = vmul.f32 %v698, %v737
    %v826 = vmul.f32 %v696, %v797
    %v827 = vmul.f32 %v698, %v793
    %v828 = vmul.f32 %v696, %v809
    %v829 = vmul.f32 %v698, %v805
    %v830 = vmul.f32 %v696, %v821
    %v831 = vmul.f32 %v698, %v817
    %v832 = vpack.c.bf16 %v798, %v784
    %v833 = vpack.c.bf16 %v799, %v785
    %v834 = vpack.c.bf16 %v822, %v810
    %v835 = vpack.c.bf16 %v823, %v811
    %v836 = vpack.c.bf16 %v826, %v824
    %v837 = vpack.c.bf16 %v827, %v825
    %v838 = vpack.c.bf16 %v830, %v828
    %v839 = vpack.c.bf16 %v831, %v829
    %v840 = vld [vmem:[%s4] sm:$0xf]
    %v841 = vld [vmem:[%s4 + $0x4] sm:$0xf]
    %v842 = vld [vmem:[%s4 + $0x8] sm:$0xf]
    %v843 = vld [vmem:[%s4 + $0xc] sm:$0xf]
    %v844 = vld [vmem:[%s4 + $0x10] sm:$0xf]
    %v845 = vld [vmem:[%s4 + $0x14] sm:$0xf]
    %v846 = vld [vmem:[%s4 + $0x18] sm:$0xf]
    %v847 = vld [vmem:[%s4 + $0x1c] sm:$0xf]
    %v848 = vld [vmem:[%s4 + $0x20] sm:$0xf]
    %v849 = vld [vmem:[%s4 + $0x24] sm:$0xf]
    %v850 = vld [vmem:[%s4 + $0x28] sm:$0xf]
    %v851 = vld [vmem:[%s4 + $0x2c] sm:$0xf]
    %v852 = vld [vmem:[%s4 + $0x30] sm:$0xf]
    %v853 = vld [vmem:[%s4 + $0x34] sm:$0xf]
    %v854 = vld [vmem:[%s4 + $0x38] sm:$0xf]
    %v855 = vld [vmem:[%s4 + $0x3c] sm:$0xf]
    %v856 = vld [vmem:[%s4 + $0x40] sm:$0xf]
    %v857 = vld [vmem:[%s4 + $0x44] sm:$0xf]
    %v858 = vld [vmem:[%s4 + $0x48] sm:$0xf]
    %v859 = vld [vmem:[%s4 + $0x4c] sm:$0xf]
    %v860 = vld [vmem:[%s4 + $0x50] sm:$0xf]
    %v861 = vld [vmem:[%s4 + $0x54] sm:$0xf]
    %v862 = vld [vmem:[%s4 + $0x58] sm:$0xf]
    %v863 = vld [vmem:[%s4 + $0x5c] sm:$0xf]
    %v864 = vld [vmem:[%s4 + $0x60] sm:$0xf]
    %v865 = vld [vmem:[%s4 + $0x64] sm:$0xf]
    %v866 = vld [vmem:[%s4 + $0x68] sm:$0xf]
    %v867 = vld [vmem:[%s4 + $0x6c] sm:$0xf]
    %v868 = vld [vmem:[%s4 + $0x70] sm:$0xf]
    %v869 = vld [vmem:[%s4 + $0x74] sm:$0xf]
    %v870 = vld [vmem:[%s4 + $0x78] sm:$0xf]
    %v871 = vld [vmem:[%s4 + $0x7c] sm:$0xf]
    %v904 = vunpack.c.l.b16 %v840
    %v905 = vunpack.c.l.b16 %v841
    %v906 = vunpack.c.l.b16 %v842
    %v907 = vunpack.c.l.b16 %v843
    %v908 = vunpack.c.l.b16 %v844
    %v909 = vunpack.c.l.b16 %v845
    %v910 = vunpack.c.l.b16 %v846
    %v911 = vunpack.c.l.b16 %v847
    %v912 = vunpack.c.l.b16 %v848
    %v913 = vunpack.c.l.b16 %v849
    %v914 = vunpack.c.l.b16 %v850
    %v915 = vunpack.c.l.b16 %v851
    %v916 = vunpack.c.l.b16 %v852
    %v917 = vunpack.c.l.b16 %v853
    %v918 = vunpack.c.l.b16 %v854
    %v919 = vunpack.c.l.b16 %v855
    %v920 = vunpack.c.l.b16 %v856
    %v921 = vunpack.c.l.b16 %v857
    %v922 = vunpack.c.l.b16 %v858
    %v923 = vunpack.c.l.b16 %v859
    %v924 = vunpack.c.l.b16 %v860
    %v925 = vunpack.c.l.b16 %v861
    %v926 = vunpack.c.l.b16 %v862
    %v927 = vunpack.c.l.b16 %v863
    %v928 = vunpack.c.l.b16 %v864
    %v929 = vunpack.c.l.b16 %v865
    %v930 = vunpack.c.l.b16 %v866
    %v931 = vunpack.c.l.b16 %v867
    %v932 = vunpack.c.l.b16 %v868
    %v933 = vunpack.c.l.b16 %v869
    %v934 = vunpack.c.l.b16 %v870
    %v935 = vunpack.c.l.b16 %v871
    %v936 = vpack.c.b16 %v905, %v904
    %v937 = vpack.c.b16 %v907, %v906
    %v938 = vpack.c.b16 %v909, %v908
    %v939 = vpack.c.b16 %v911, %v910
    %v940 = vpack.c.b16 %v913, %v912
    %v941 = vpack.c.b16 %v915, %v914
    %v942 = vpack.c.b16 %v917, %v916
    %v943 = vpack.c.b16 %v919, %v918
    %v944 = vpack.c.b16 %v921, %v920
    %v945 = vpack.c.b16 %v923, %v922
    %v946 = vpack.c.b16 %v925, %v924
    %v947 = vpack.c.b16 %v927, %v926
    %v948 = vpack.c.b16 %v929, %v928
    %v949 = vpack.c.b16 %v931, %v930
    %v950 = vpack.c.b16 %v933, %v932
    %v951 = vpack.c.b16 %v935, %v934
    %968 = vmatprep.subr.bf16.mxu0 0
    %969 = vmatpush1.bf16.msra.mxu0 %v943
    %970 = vmatprep.subr.bf16.mxu0 0
    %971 = vmatpush1.bf16.msra.mxu0 %v942
    %972 = vmatprep.subr.bf16.mxu0 0
    %973 = vmatpush1.bf16.msra.mxu0 %v941
    %974 = vmatprep.subr.bf16.mxu0 0
    %975 = vmatpush1.bf16.msra.mxu0 %v940
    %976 = vmatprep.subr.bf16.mxu0 0
    %977 = vmatpush1.bf16.msra.mxu0 %v939
    %978 = vmatprep.subr.bf16.mxu0 0
    %979 = vmatpush1.bf16.msra.mxu0 %v938
    %980 = vmatprep.subr.bf16.mxu0 0
    %981 = vmatpush1.bf16.msra.mxu0 %v937
    %982 = vmatprep.subr.bf16.mxu0 0
    %983 = vmatpush1.bf16.msra.mxu0 %v936
    %984 = vmatprep.subr.bf16.mxu0 0
    %985 = vmatpush2.bf16.msra.mxu0 %v951
    %986 = vmatprep.subr.bf16.mxu0 0
    %987 = vmatpush2.bf16.msra.mxu0 %v950
    %988 = vmatprep.subr.bf16.mxu0 0
    %989 = vmatpush2.bf16.msra.mxu0 %v949
    %990 = vmatprep.subr.bf16.mxu0 0
    %991 = vmatpush2.bf16.msra.mxu0 %v948
    %992 = vmatprep.subr.bf16.mxu0 0
    %993 = vmatpush2.bf16.msra.mxu0 %v947
    %994 = vmatprep.subr.bf16.mxu0 0
    %995 = vmatpush2.bf16.msra.mxu0 %v946
    %996 = vmatprep.subr.bf16.mxu0 0
    %997 = vmatpush2.bf16.msra.mxu0 %v945
    %998 = vmatprep.subr.bf16.mxu0 0
    %999 = vmatpush2.bf16.msra.mxu0 %v944
    %1000 = vmatprep.mubr.bf16.mxu0 %v833
    %1001 = vmatmul.mubr.bf16.gmra.mxu0 %v832
    %v1002 = vpop.f32.mrf.mxu0
    %v1003 = vadd.f32 0.0, %v1002
    %v1004 = vpop.f32.mrf.mxu0
    %v1005 = vpop.f32.mrf.mxu0
    %v1006 = vadd.f32 0.0, %v1005
    %v1007 = vpop.f32.mrf.mxu0
    %1008 = vmatprep.mubr.bf16.mxu0 %v835
    %1009 = vmatmul.mubr.bf16.gmra.mxu0 %v834
    %v1010 = vpop.f32.mrf.mxu0
    %v1011 = vadd.f32 0.0, %v1010
    %v1012 = vpop.f32.mrf.mxu0
    %v1013 = vpop.f32.mrf.mxu0
    %v1014 = vadd.f32 0.0, %v1013
    %v1015 = vpop.f32.mrf.mxu0
    %1016 = vmatprep.mubr.bf16.mxu0 %v837
    %1017 = vmatmul.mubr.bf16.gmra.mxu0 %v836
    %v1018 = vpop.f32.mrf.mxu0
    %v1019 = vadd.f32 0.0, %v1018
    %v1020 = vpop.f32.mrf.mxu0
    %v1021 = vpop.f32.mrf.mxu0
    %v1022 = vadd.f32 0.0, %v1021
    %v1023 = vpop.f32.mrf.mxu0
    %1024 = vmatprep.mubr.bf16.mxu0 %v839
    %1025 = vmatmul.mubr.bf16.gmra.mxu0 %v838
    %v1026 = vpop.f32.mrf.mxu0
    %v1027 = vadd.f32 0.0, %v1026
    %v1028 = vpop.f32.mrf.mxu0
    %v1029 = vpop.f32.mrf.mxu0
    %v1030 = vadd.f32 0.0, %v1029
    %v1031 = vpop.f32.mrf.mxu0
    %1032 = vdwg.mxu0
    %v1033 = vmax.f32 %v1003, %v1006
    %v1034 = vmax.f32 %v1033, %v1011
    %v1035 = vmax.f32 %v1034, %v1014
    %v1036 = vmax.f32 %v1035, %v1019
    %v1037 = vmax.f32 %v1036, %v1022
    %v1038 = vmax.f32 %v1037, %v1027
    %v1039 = vmax.f32 %v1038, %v1030
    %v1040 = vsub.f32 %v1003, %v1039
    %v1041 = vmul.f32 %v1040, 1.442695
    %v1042 = vpow.pop %v1041
    %v1043 = vsub.f32 %v1006, %v1039
    %v1044 = vmul.f32 %v1043, 1.442695
    %v1045 = vpow.pop %v1044
    %v1046 = vsub.f32 %v1011, %v1039
    %v1047 = vmul.f32 %v1046, 1.442695
    %v1048 = vpow.pop %v1047
    %v1049 = vsub.f32 %v1014, %v1039
    %v1050 = vmul.f32 %v1049, 1.442695
    %v1051 = vpow.pop %v1050
    %v1052 = vsub.f32 %v1019, %v1039
    %v1053 = vmul.f32 %v1052, 1.442695
    %v1054 = vpow.pop %v1053
    %v1055 = vsub.f32 %v1022, %v1039
    %v1056 = vmul.f32 %v1055, 1.442695
    %v1057 = vpow.pop %v1056
    %v1058 = vsub.f32 %v1027, %v1039
    %v1059 = vmul.f32 %v1058, 1.442695
    %v1060 = vpow.pop %v1059
    %v1061 = vsub.f32 %v1030, %v1039
    %v1062 = vmul.f32 %v1061, 1.442695
    %v1063 = vpow.pop %v1062
    %v1064 = vadd.f32 %v1042, %v1045
    %v1065 = vadd.f32 %v1064, %v1048
    %v1066 = vadd.f32 %v1065, %v1051
    %v1067 = vadd.f32 %v1066, %v1054
    %v1068 = vadd.f32 %v1067, %v1057
    %v1069 = vadd.f32 %v1068, %v1060
    %v1070 = vadd.f32 %v1069, %v1063
    %v1071 = vrcp.pop %v1070
    %v1072 = vmul.f32 %v1042, %v1071
    %v1073 = vmul.f32 %v1045, %v1071
    %1075 = vrot.lane.b32.xlu0 %v1073, 100
    %v1076 = vpop.permute.xlu0 %1075
    %1078 = vrot.lane.b32.xlu0 %v1073, 4
    %v1079 = vpop.permute.xlu0 %1078
    %vm1081 = vcmask 31744
    %v1082 = vsel %vm1081, %v1076, %v1079
    %v1083 = vmul.f32 %v1048, %v1071
    %1085 = vrot.lane.b32.xlu0 %v1083, 104
    %v1086 = vpop.permute.xlu0 %1085
    %1088 = vrot.lane.b32.xlu0 %v1083, 8
    %v1089 = vpop.permute.xlu0 %1088
    %vm1091 = vcmask 64512
    %v1092 = vsel %vm1091, %v1086, %v1089
    %v1093 = vmul.f32 %v1051, %v1071
    %1095 = vrot.lane.b32.xlu0 %v1093, 108
    %v1096 = vpop.permute.xlu0 %1095
    %1098 = vrot.lane.b32.xlu0 %v1093, 12
    %v1099 = vpop.permute.xlu0 %1098
    %vm1101 = vcmask 97280
    %v1102 = vsel %vm1101, %v1096, %v1099
    %v1103 = vmul.f32 %v1054, %v1071
    %1105 = vrot.lane.b32.xlu0 %v1103, 112
    %v1106 = vpop.permute.xlu0 %1105
    %1108 = vrot.lane.b32.xlu0 %v1103, 16
    %v1109 = vpop.permute.xlu0 %1108
    %vm1111 = vcmask 130048
    %v1112 = vsel %vm1111, %v1106, %v1109
    %v1113 = vmul.f32 %v1057, %v1071
    %1115 = vrot.lane.b32.xlu0 %v1113, 116
    %v1116 = vpop.permute.xlu0 %1115
    %1118 = vrot.lane.b32.xlu0 %v1113, 20
    %v1119 = vpop.permute.xlu0 %1118
    %vm1121 = vcmask 162816
    %v1122 = vsel %vm1121, %v1116, %v1119
    %v1123 = vmul.f32 %v1060, %v1071
    %1125 = vrot.lane.b32.xlu0 %v1123, 120
    %v1126 = vpop.permute.xlu0 %1125
    %1128 = vrot.lane.b32.xlu0 %v1123, 24
    %v1129 = vpop.permute.xlu0 %1128
    %vm1131 = vcmask 195584
    %v1132 = vsel %vm1131, %v1126, %v1129
    %v1133 = vmul.f32 %v1063, %v1071
    %1135 = vrot.lane.b32.xlu0 %v1133, 124
    %v1136 = vpop.permute.xlu0 %1135
    %1138 = vrot.lane.b32.xlu0 %v1133, 28
    %v1139 = vpop.permute.xlu0 %1138
    %vm1141 = vcmask 228352
    %v1142 = vsel %vm1141, %v1136, %v1139
    %v1143 = vadd.f32 %v1072, %v1082
    %v1144 = vadd.f32 %v1143, %v1092
    %v1145 = vadd.f32 %v1144, %v1102
    %v1146 = vadd.f32 %v1145, %v1112
    %v1147 = vadd.f32 %v1146, %v1122
    %v1148 = vadd.f32 %v1147, %v1132
    %v1149 = vadd.f32 %v1148, %v1142
    %v1150 = vpack.c.bf16 %v1149, %v1149
    %v1151 = vld [vmem:[%s5] sm:$0xff]
    %v1152 = vld [vmem:[%s5 + $0x8] sm:$0xff]
    %v1153 = vld [vmem:[%s5 + $0x10] sm:$0xff]
    %v1154 = vld [vmem:[%s5 + $0x18] sm:$0xff]
    %v1159 = vunpack.c.l.b16 %v1151
    %v1160 = vunpack.c.h.b16 %v1151
    %v1161 = vunpack.c.l.b16 %v1152
    %v1162 = vunpack.c.h.b16 %v1152
    %v1163 = vunpack.c.l.b16 %v1153
    %v1164 = vunpack.c.h.b16 %v1153
    %v1165 = vunpack.c.l.b16 %v1154
    %v1166 = vunpack.c.h.b16 %v1154
    %v1167 = vpack.c.b16 %v1161, %v1159
    %v1168 = vpack.c.b16 %v1162, %v1160
    %v1169 = vpack.c.b16 %v1165, %v1163
    %v1170 = vpack.c.b16 %v1166, %v1164
    %v1176 = vsel %vm816, %v1150, 0
    %1178 = vmatprep.subr.bf16.mxu0 0
    %1179 = vmatpush1.bf16.msra.mxu0 0
    %1180 = vmatprep.subr.bf16.mxu0 0
    %1181 = vmatpush1.bf16.msra.mxu0 0
    %1182 = vmatprep.subr.bf16.mxu0 0
    %1183 = vmatpush1.bf16.msra.mxu0 0
    %1184 = vmatprep.subr.bf16.mxu0 0
    %1185 = vmatpush1.bf16.msra.mxu0 0
    %1186 = vmatprep.subr.bf16.mxu0 0
    %1187 = vmatpush1.bf16.msra.mxu0 0
    %1188 = vmatprep.subr.bf16.mxu0 0
    %1189 = vmatpush1.bf16.msra.mxu0 0
    %1190 = vmatprep.subr.bf16.mxu0 %v1170
    %1191 = vmatpush1.bf16.msra.mxu0 %v1169
    %1192 = vmatprep.subr.bf16.mxu0 %v1168
    %1193 = vmatpush1.bf16.msra.mxu0 %v1167
    %1194 = vmatprep.subr.bf16.mxu0 0
    %1195 = vmatpush2.bf16.msra.mxu0 0
    %1196 = vmatprep.subr.bf16.mxu0 0
    %1197 = vmatpush2.bf16.msra.mxu0 0
    %1198 = vmatprep.subr.bf16.mxu0 0
    %1199 = vmatpush2.bf16.msra.mxu0 0
    %1200 = vmatprep.subr.bf16.mxu0 0
    %1201 = vmatpush2.bf16.msra.mxu0 0
    %1202 = vmatprep.subr.bf16.mxu0 0
    %1203 = vmatpush2.bf16.msra.mxu0 0
    %1204 = vmatprep.subr.bf16.mxu0 0
    %1205 = vmatpush2.bf16.msra.mxu0 0
    %1206 = vmatprep.subr.bf16.mxu0 0
    %1207 = vmatpush2.bf16.msra.mxu0 0
    %1208 = vmatprep.subr.bf16.mxu0 0
    %1209 = vmatpush2.bf16.msra.mxu0 0
    %1210 = vmatprep.mubr.bf16.mxu0 0
    %1211 = vmatmul.mubr.bf16.gmra.mxu0 %v1176
    %v1212 = vpop.f32.mrf.mxu0
    %v1213 = vadd.f32 0.0, %v1212
    %v1214 = vpop.f32.mrf.mxu0
    %v1215 = vadd.f32 0.0, %v1214
    %v1216 = vpop.f32.mrf.mxu0
    %v1217 = vpop.f32.mrf.mxu0
    %1218 = vdwg.mxu0
    %v1219 = vmul.f32 %v1213, %v778
    %v1220 = vmul.f32 %v1215, %v780
    %v1221 = vpack.c.bf16 %v1219, %v1219
    %v1222 = vpack.c.bf16 %v1220, %v1220
    %v1223 = vld [vmem:[%s6] sm:$0xf]
    %v1224 = vld [vmem:[%s6 + $0x4] sm:$0xf]
    %v1225 = vld [vmem:[%s6 + $0x8] sm:$0xf]
    %v1226 = vld [vmem:[%s6 + $0xc] sm:$0xf]
    %v1227 = vld [vmem:[%s6 + $0x10] sm:$0xf]
    %v1228 = vld [vmem:[%s6 + $0x14] sm:$0xf]
    %v1229 = vld [vmem:[%s6 + $0x18] sm:$0xf]
    %v1230 = vld [vmem:[%s6 + $0x1c] sm:$0xf]
    %v1231 = vld [vmem:[%s6 + $0x20] sm:$0xf]
    %v1232 = vld [vmem:[%s6 + $0x24] sm:$0xf]
    %v1233 = vld [vmem:[%s6 + $0x28] sm:$0xf]
    %v1234 = vld [vmem:[%s6 + $0x2c] sm:$0xf]
    %v1235 = vld [vmem:[%s6 + $0x30] sm:$0xf]
    %v1236 = vld [vmem:[%s6 + $0x34] sm:$0xf]
    %v1237 = vld [vmem:[%s6 + $0x38] sm:$0xf]
    %v1238 = vld [vmem:[%s6 + $0x3c] sm:$0xf]
    %v1239 = vld [vmem:[%s6 + $0x40] sm:$0xf]
    %v1240 = vld [vmem:[%s6 + $0x44] sm:$0xf]
    %v1241 = vld [vmem:[%s6 + $0x48] sm:$0xf]
    %v1242 = vld [vmem:[%s6 + $0x4c] sm:$0xf]
    %v1243 = vld [vmem:[%s6 + $0x50] sm:$0xf]
    %v1244 = vld [vmem:[%s6 + $0x54] sm:$0xf]
    %v1245 = vld [vmem:[%s6 + $0x58] sm:$0xf]
    %v1246 = vld [vmem:[%s6 + $0x5c] sm:$0xf]
    %v1247 = vld [vmem:[%s6 + $0x60] sm:$0xf]
    %v1248 = vld [vmem:[%s6 + $0x64] sm:$0xf]
    %v1249 = vld [vmem:[%s6 + $0x68] sm:$0xf]
    %v1250 = vld [vmem:[%s6 + $0x6c] sm:$0xf]
    %v1251 = vld [vmem:[%s6 + $0x70] sm:$0xf]
    %v1252 = vld [vmem:[%s6 + $0x74] sm:$0xf]
    %v1253 = vld [vmem:[%s6 + $0x78] sm:$0xf]
    %v1254 = vld [vmem:[%s6 + $0x7c] sm:$0xf]
    %v1255 = vld [vmem:[%s7] sm:$0x1]
    %v1257 = vlaneseq
    %v1258 = vshrl.u32 %v1257, 7
    %v1259 = vsub.s32 0, %v1258
    %v1260 = vrot.slane %v1255, %v1259
    %v1294 = vunpack.c.l.b16 %v1223
    %v1295 = vunpack.c.l.b16 %v1224
    %v1296 = vunpack.c.l.b16 %v1225
    %v1297 = vunpack.c.l.b16 %v1226
    %v1298 = vunpack.c.l.b16 %v1227
    %v1299 = vunpack.c.l.b16 %v1228
    %v1300 = vunpack.c.l.b16 %v1229
    %v1301 = vunpack.c.l.b16 %v1230
    %v1302 = vunpack.c.l.b16 %v1231
    %v1303 = vunpack.c.l.b16 %v1232
    %v1304 = vunpack.c.l.b16 %v1233
    %v1305 = vunpack.c.l.b16 %v1234
    %v1306 = vunpack.c.l.b16 %v1235
    %v1307 = vunpack.c.l.b16 %v1236
    %v1308 = vunpack.c.l.b16 %v1237
    %v1309 = vunpack.c.l.b16 %v1238
    %v1310 = vunpack.c.l.b16 %v1239
    %v1311 = vunpack.c.l.b16 %v1240
    %v1312 = vunpack.c.l.b16 %v1241
    %v1313 = vunpack.c.l.b16 %v1242
    %v1314 = vunpack.c.l.b16 %v1243
    %v1315 = vunpack.c.l.b16 %v1244
    %v1316 = vunpack.c.l.b16 %v1245
    %v1317 = vunpack.c.l.b16 %v1246
    %v1318 = vunpack.c.l.b16 %v1247
    %v1319 = vunpack.c.l.b16 %v1248
    %v1320 = vunpack.c.l.b16 %v1249
    %v1321 = vunpack.c.l.b16 %v1250
    %v1322 = vunpack.c.l.b16 %v1251
    %v1323 = vunpack.c.l.b16 %v1252
    %v1324 = vunpack.c.l.b16 %v1253
    %v1325 = vunpack.c.l.b16 %v1254
    %v1326 = vpack.c.b16 %v1295, %v1294
    %v1327 = vpack.c.b16 %v1297, %v1296
    %v1328 = vpack.c.b16 %v1299, %v1298
    %v1329 = vpack.c.b16 %v1301, %v1300
    %v1330 = vpack.c.b16 %v1303, %v1302
    %v1331 = vpack.c.b16 %v1305, %v1304
    %v1332 = vpack.c.b16 %v1307, %v1306
    %v1333 = vpack.c.b16 %v1309, %v1308
    %v1334 = vpack.c.b16 %v1311, %v1310
    %v1335 = vpack.c.b16 %v1313, %v1312
    %v1336 = vpack.c.b16 %v1315, %v1314
    %v1337 = vpack.c.b16 %v1317, %v1316
    %v1338 = vpack.c.b16 %v1319, %v1318
    %v1339 = vpack.c.b16 %v1321, %v1320
    %v1340 = vpack.c.b16 %v1323, %v1322
    %v1341 = vpack.c.b16 %v1325, %v1324
    %1358 = vmatprep.subr.bf16.mxu0 0
    %1359 = vmatpush1.bf16.msra.mxu0 %v1333
    %1360 = vmatprep.subr.bf16.mxu0 0
    %1361 = vmatpush1.bf16.msra.mxu0 %v1332
    %1362 = vmatprep.subr.bf16.mxu0 0
    %1363 = vmatpush1.bf16.msra.mxu0 %v1331
    %1364 = vmatprep.subr.bf16.mxu0 0
    %1365 = vmatpush1.bf16.msra.mxu0 %v1330
    %1366 = vmatprep.subr.bf16.mxu0 0
    %1367 = vmatpush1.bf16.msra.mxu0 %v1329
    %1368 = vmatprep.subr.bf16.mxu0 0
    %1369 = vmatpush1.bf16.msra.mxu0 %v1328
    %1370 = vmatprep.subr.bf16.mxu0 0
    %1371 = vmatpush1.bf16.msra.mxu0 %v1327
    %1372 = vmatprep.subr.bf16.mxu0 0
    %1373 = vmatpush1.bf16.msra.mxu0 %v1326
    %1374 = vmatprep.subr.bf16.mxu0 0
    %1375 = vmatpush2.bf16.msra.mxu0 %v1341
    %1376 = vmatprep.subr.bf16.mxu0 0
    %1377 = vmatpush2.bf16.msra.mxu0 %v1340
    %1378 = vmatprep.subr.bf16.mxu0 0
    %1379 = vmatpush2.bf16.msra.mxu0 %v1339
    %1380 = vmatprep.subr.bf16.mxu0 0
    %1381 = vmatpush2.bf16.msra.mxu0 %v1338
    %1382 = vmatprep.subr.bf16.mxu0 0
    %1383 = vmatpush2.bf16.msra.mxu0 %v1337
    %1384 = vmatprep.subr.bf16.mxu0 0
    %1385 = vmatpush2.bf16.msra.mxu0 %v1336
    %1386 = vmatprep.subr.bf16.mxu0 0
    %1387 = vmatpush2.bf16.msra.mxu0 %v1335
    %1388 = vmatprep.subr.bf16.mxu0 0
    %1389 = vmatpush2.bf16.msra.mxu0 %v1334
    %1390 = vmatprep.mubr.bf16.mxu0 %v1222
    %1391 = vmatmul.mubr.bf16.gmra.mxu0 %v1221
    %v1392 = vpop.f32.mrf.mxu0
    %v1393 = vadd.f32 %v1260, %v1392
    %v1394 = vpop.f32.mrf.mxu0
    %v1395 = vpop.f32.mrf.mxu0
    %v1396 = vpop.f32.mrf.mxu0
    %1397 = vdwg.mxu0
    %v1398 = vld [vmem:[%s1] sm:$0xff]
    %v1399 = vmul.f32 %v1398, 0.5
    %v1400 = vadd.f32 %v1393, %v1399
    %1401 = vst.msk [vmem:[#allocation5] sm:$0xff] %vm816, %v1400
    // Predicated region
    $region38: #{tpu_custom_call.1} parent=1 // pred_check
      _
    $region39: #{tpu_custom_call.1} parent=1 // pred_check_branch
      %1403 = sbr.rel (0) target = $region41
    $region40: #{tpu_custom_call.1} parent=1 // pred_region
      %s1405 = ssub.s32 128, 128
      %1406 = vsyncadd [#allocation4], %s1405
      %s1408 = sshll.u32 [#allocation5], 4
      %s1409 = int_to_ptr.vmem [resolvable:$true] %s1408
      %1411 = dma.vmem_to_hbm [thread:$0]  %s1409, 128, %s8, [#allocation4]
    $region41: #{tpu_custom_call.1} parent=1 // pred_fallthru
      _
    // Predicated region
    $region42: #{tpu_custom_call.1} parent=1 // pred_check
      _
    $region43: #{tpu_custom_call.1} parent=1 // pred_check_branch
      %1413 = sbr.rel (0) target = $region45
    $region44: #{tpu_custom_call.1} parent=1 // pred_region
      %1414 = dma.done [#allocation4], 128
    $region45: #{tpu_custom_call.1} parent=1 // pred_fallthru
      _
    %1415 = vsyncpa [#allocation3], 1
    %1416 = vsyncpa [#allocation4], 1

</llo_original>
